<compile_context>
chip_gen: v5e
topology: v5e:2x2
jax: 0.10.0
libtpu: 0.0.40
codegen_flags: <defaults>
</compile_context>

<pallas_src>
import math
from functools import partial

import jax
import jax.numpy as jnp
import numpy as np
from jax.experimental import pallas as pl
from jax.experimental.pallas import tpu as pltpu

# ----------------------------- constants -----------------------------------
COORD_DIM = 2
FREQ_NUM = 32
MIN_RADIUS = 0.1
MAX_RADIUS = 360.0
IN_DIM = COORD_DIM * FREQ_NUM * 2      # 128
HIDDEN_DIM = 512
OUT_DIM = 256
NEG_SLOPE = 0.2                        # Space2Vec get_activation_function("leakyrelu")
LN_EPS = 1e-5                          # torch.nn.LayerNorm default
TILE_R = 1024                          # rows per grid step (MXU-filling, ~8-10 MiB VMEM)


def _round_up(n, m):
    return ((n + m - 1) // m) * m


# ----------------------------- kernel ---------------------------------------
def grid_cell_enc_kernel(coords_ref, freq_ref, phase_ref, w1_ref, b1_ref,
                         g_ref, beta_ref, w2_ref, b2_ref, out_ref, acc_ref):
    m = pl.program_id(2)               # replication index (innermost, "arbitrary")

    @pl.when(m == 0)
    def _compute():
        coords = coords_ref[...]                                 # (T, 2) f32
        t = coords.shape[0]
        # x in lanes [0,64), y in lanes [64,128): one select, one fmul, one fadd.
        lane = jax.lax.broadcasted_iota(jnp.int32, (t, IN_DIM), 1)
        slab = jnp.where(lane < FREQ_NUM * 2, coords[:, 0:1], coords[:, 1:2])
        # even lanes: sin(f*c); odd lanes: sin(f*c + pi/2) = cos(f*c)
        embed = jnp.sin(slab * freq_ref[...] + phase_ref[...])   # (T, 128) f32

        # --- FFN layer 1: Linear(128->512) + LeakyReLU + LayerNorm(512) ---
        h = jnp.dot(embed.astype(jnp.bfloat16), w1_ref[...],
                    preferred_element_type=jnp.float32) + b1_ref[...]
        h = jnp.where(h >= 0, h, NEG_SLOPE * h)
        # fused LayerNorm stats: one sweep (E[h], E[h^2]); biased variance (torch default)
        mu = jnp.mean(h, axis=-1, keepdims=True)
        ms = jnp.mean(h * h, axis=-1, keepdims=True)
        h = (h - mu) * jax.lax.rsqrt(ms - mu * mu + LN_EPS) * g_ref[...] + beta_ref[...]

        # --- FFN layer 2: Linear(512->256) + LeakyReLU ---
        o = jnp.dot(h.astype(jnp.bfloat16), w2_ref[...],
                    preferred_element_type=jnp.float32) + b2_ref[...]
        acc_ref[...] = jnp.where(o >= 0, o, NEG_SLOPE * o)

    # Fused torch.cat([emb]*add_multiples, dim=1): same tile written to slot m.
    out_ref[...] = acc_ref[...]


# ----------------------------- parameters -----------------------------------
def make_freq_row():
    """(1, 128) per-lane angle multipliers: [f0,f0,f1,f1,...] tiled for both coords."""
    log_inc = math.log(MAX_RADIUS / MIN_RADIUS) / (FREQ_NUM - 1.0)
    timescales = MIN_RADIUS * np.exp(np.arange(FREQ_NUM, dtype=np.float64) * log_inc)
    freq_list = (1.0 / timescales).astype(np.float32)            # (32,)
    freq_seg = np.repeat(freq_list, 2)                            # (64,)
    return jnp.asarray(np.tile(freq_seg, COORD_DIM)[None, :])     # (1, 128)


def make_phase():
    """(1, 128) phase: 0 on even lanes (sin), pi/2 on odd lanes (-> cos)."""
    phase = np.zeros((1, IN_DIM), dtype=np.float32)
    phase[0, 1::2] = np.pi / 2
    return jnp.asarray(phase)


def init_params(key):
    k1, k2, k3, k4 = jax.random.split(key, 4)

    def xavier(k, fan_in, fan_out):
        bound = math.sqrt(6.0 / (fan_in + fan_out))
        return jax.random.uniform(k, (fan_in, fan_out), jnp.float32, -bound, bound)

    # TODO(synk): loading the .pth.tar checkpoint weights has no in-script equivalent.
    return {
        "freq": make_freq_row(),                                  # (1, 128) f32
        "phase": make_phase(),                                    # (1, 128) f32
        "w1": xavier(k1, IN_DIM, HIDDEN_DIM).astype(jnp.bfloat16),     # (128, 512)
        "b1": (0.01 * jax.random.normal(k2, (1, HIDDEN_DIM))).astype(jnp.float32),
        "gamma": jnp.ones((1, HIDDEN_DIM), jnp.float32),          # LayerNorm weight
        "beta": jnp.zeros((1, HIDDEN_DIM), jnp.float32),          # LayerNorm bias
        "w2": xavier(k3, HIDDEN_DIM, OUT_DIM).astype(jnp.bfloat16),    # (512, 256)
        "b2": (0.01 * jax.random.normal(k4, (1, OUT_DIM))).astype(jnp.float32),
    }


# ----------------------------- wrapper ---------------------------------------
def _choose_tile_p(B, P):
    tile = min(TILE_R, P)
    # v7x megacore: guarantee >=2 steps on the parallel grid axes when possible,
    # otherwise one TensorCore idles.
    if B == 1 and P > 8 and pl.cdiv(P, tile) < 2:
        tile = _round_up(pl.cdiv(P, 2), 8)
    return tile


def _location_encode(coords, add_multiples, params):
    """coords: (B, P, 2) f32 -> (B, add_multiples, P, 256) f32 (replication fused)."""
    B, P, _ = coords.shape
    tile_p = _choose_tile_p(B, P)
    grid = (B, pl.cdiv(P, tile_p), add_multiples)
    const = lambda b, i, m: (0, 0)
    return pl.pallas_call(
        grid_cell_enc_kernel,
        out_shape=jax.ShapeDtypeStruct((B, add_multiples, P, OUT_DIM), jnp.float32),
        grid=grid,
        in_specs=[
            pl.BlockSpec((None, tile_p, COORD_DIM), lambda b, i, m: (b, i, 0)),
            pl.BlockSpec((1, IN_DIM), const),             # freq row (resident)
            pl.BlockSpec((1, IN_DIM), const),             # phase
            pl.BlockSpec((IN_DIM, HIDDEN_DIM), const),    # w1 (bf16)
            pl.BlockSpec((1, HIDDEN_DIM), const),         # b1
            pl.BlockSpec((1, HIDDEN_DIM), const),         # gamma
            pl.BlockSpec((1, HIDDEN_DIM), const),         # beta
            pl.BlockSpec((HIDDEN_DIM, OUT_DIM), const),   # w2 (bf16)
            pl.BlockSpec((1, OUT_DIM), const),            # b2
        ],
        out_specs=pl.BlockSpec((None, None, tile_p, OUT_DIM),
                               lambda b, i, m: (b, m, i, 0)),
        scratch_shapes=[pltpu.VMEM((tile_p, OUT_DIM), jnp.float32)],
        compiler_params=pltpu.CompilerParams(
            dimension_semantics=("parallel", "parallel", "arbitrary"),
            vmem_limit_bytes=48 * 1024 * 1024),
    )(coords, params["freq"], params["phase"], params["w1"], params["b1"],
      params["gamma"], params["beta"], params["w2"], params["b2"])


@partial(jax.jit, static_argnames=("add_multiples",))
def dummy_enc_forward(x, params, add_multiples=2):
    """x: (B, P, 2) coords -> (B, P*add_multiples, 256)  [int branch of DummyEnc]."""
    B, P, _ = x.shape
    out4 = _location_encode(x.astype(jnp.float32), add_multiples, params)
    # (B, A, P, 256) -> (B, A*P, 256): contiguous collapse, no data movement.
    return out4.reshape(B, add_multiples * P, OUT_DIM)


@jax.jit
def dummy_enc_forward_noint(x, params):
    """Non-int `add_multiples` branch: x (B, 2) -> (B, 256) (unsqueeze/squeeze dim=1)."""
    B = x.shape[0]
    out4 = _location_encode(x.astype(jnp.float32)[None, :, :], 1, params)
    return out4.reshape(B, OUT_DIM)


# ----------------------------- pure-JAX reference -----------------------------
def _reference_forward(x, params, add_multiples):
    B, P, _ = x.shape
    c = x.reshape(B * P, COORD_DIM).astype(jnp.float32)
    slab = jnp.concatenate([jnp.repeat(c[:, 0:1], FREQ_NUM * 2, axis=1),
                            jnp.repeat(c[:, 1:2], FREQ_NUM * 2, axis=1)], axis=1)
    embed = jnp.sin(slab * params["freq"] + params["phase"])
    h = jnp.dot(embed.astype(jnp.bfloat16), params["w1"],
                preferred_element_type=jnp.float32) + params["b1"]
    h = jnp.where(h >= 0, h, NEG_SLOPE * h)
    mu = jnp.mean(h, -1, keepdims=True)
    var = jnp.mean(h * h, -1, keepdims=True) - mu * mu
    h = (h - mu) * jax.lax.rsqrt(var + LN_EPS) * params["gamma"] + params["beta"]
    o = jnp.dot(h.astype(jnp.bfloat16), params["w2"],
                preferred_element_type=jnp.float32) + params["b2"]
    o = jnp.where(o >= 0, o, NEG_SLOPE * o)
    emb = o.reshape(B, P, OUT_DIM)
    return jnp.concatenate([emb] * add_multiples, axis=1)


# ----------------------------- main -------------------------------------------
if __name__ == "__main__":
    key = jax.random.PRNGKey(0)
    k_param, k_x = jax.random.split(key)

    params = init_params(k_param)

    B, P = 2, 8
    add_multiples = 2
    # lon/lat-like coordinates in [-180, 180)
    x = jax.random.uniform(k_x, (B, P, COORD_DIM), jnp.float32, minval=-180.0, maxval=180.0)

    out = dummy_enc_forward(x, params, add_multiples=add_multiples)
    out = jax.block_until_ready(out)
    assert out.shape == (B, P * add_multiples, OUT_DIM), out.shape
    assert bool(jnp.all(jnp.isfinite(out)))
    # replicated halves must be identical (cat semantics)
    assert bool(jnp.array_equal(out[:, :P, :], out[:, P:, :]))

    # compare against a pure-JAX reference of the same math
    ref = jax.block_until_ready(_reference_forward(x, params, add_multiples))
    np.testing.assert_allclose(np.asarray(out), np.asarray(ref), rtol=2e-2, atol=2e-2)

    # also exercise the non-int branch once
    out2 = jax.block_until_ready(dummy_enc_forward_noint(x[:, 0, :], params))
    assert out2.shape == (B, OUT_DIM), out2.shape
    assert bool(jnp.all(jnp.isfinite(out2)))

    print("KERNEL_OK")
</pallas_src>

<mosaic_0001>
module attributes {stable_mosaic.version = 11 : i64} {
  func.func @grid_cell_enc_kernel(%arg0: i32, %arg1: i32, %arg2: i32, %arg3: memref<1x8x2xf32, #tpu.memory_space<vmem>>, %arg4: memref<1x128xf32, #tpu.memory_space<vmem>>, %arg5: memref<1x128xf32, #tpu.memory_space<vmem>>, %arg6: memref<128x512xbf16, #tpu.memory_space<vmem>>, %arg7: memref<1x512xf32, #tpu.memory_space<vmem>>, %arg8: memref<1x512xf32, #tpu.memory_space<vmem>>, %arg9: memref<1x512xf32, #tpu.memory_space<vmem>>, %arg10: memref<512x256xbf16, #tpu.memory_space<vmem>>, %arg11: memref<1x256xf32, #tpu.memory_space<vmem>>, %arg12: memref<1x1x8x256xf32, #tpu.memory_space<vmem>>, %arg13: memref<8x256xf32, #tpu.memory_space<vmem>>) attributes {dimension_semantics = [#tpu.dimension_semantics<parallel>, #tpu.dimension_semantics<parallel>, #tpu.dimension_semantics<arbitrary>], iteration_bounds = array<i64: 2, 1, 2>, scalar_prefetch = 0 : i64, scratch_operands = 1 : i64, tpu.core_type = #tpu.core_type<tc>, window_params = [{transform_indices = @transform_0, window_bounds = array<i64: 1, 8, 2>}, {pipeline_mode = #tpu.pipeline_mode<synchronous>, transform_indices = @transform_1, window_bounds = array<i64: 1, 128>}, {pipeline_mode = #tpu.pipeline_mode<synchronous>, transform_indices = @transform_2, window_bounds = array<i64: 1, 128>}, {pipeline_mode = #tpu.pipeline_mode<synchronous>, transform_indices = @transform_3, window_bounds = array<i64: 128, 512>}, {pipeline_mode = #tpu.pipeline_mode<synchronous>, transform_indices = @transform_4, window_bounds = array<i64: 1, 512>}, {pipeline_mode = #tpu.pipeline_mode<synchronous>, transform_indices = @transform_5, window_bounds = array<i64: 1, 512>}, {pipeline_mode = #tpu.pipeline_mode<synchronous>, transform_indices = @transform_6, window_bounds = array<i64: 1, 512>}, {pipeline_mode = #tpu.pipeline_mode<synchronous>, transform_indices = @transform_7, window_bounds = array<i64: 512, 256>}, {pipeline_mode = #tpu.pipeline_mode<synchronous>, transform_indices = @transform_8, window_bounds = array<i64: 1, 256>}, {transform_indices = @transform_9, window_bounds = array<i64: 1, 1, 8, 256>}]} {
    %c0_i32 = arith.constant 0 : i32
    %0 = arith.cmpi eq, %arg2, %c0_i32 : i32
    %1 = arith.extui %0 : i1 to i32
    %c0_i32_0 = arith.constant 0 : i32
    %2 = arith.cmpi ne, %1, %c0_i32_0 : i32
    scf.if %2 {
      %c0_6 = arith.constant 0 : index
      %c0_7 = arith.constant 0 : index
      %c0_8 = arith.constant 0 : index
      %7 = vector.load %arg3[%c0_6, %c0_7, %c0_8] : memref<1x8x2xf32, #tpu.memory_space<vmem>>, vector<1x8x2xf32>
      %8 = vector.shape_cast %7 : vector<1x8x2xf32> to vector<8x2xf32>
      %9 = tpu.iota {dimensions = array<i32: 1>} : vector<8x128xi32>
      %c64_i32 = arith.constant 64 : i32
      %10 = vector.broadcast %c64_i32 : i32 to vector<8x128xi32>
      %11 = arith.cmpi slt, %9, %10 : vector<8x128xi32>
      %12 = vector.extract_strided_slice %8 {offsets = [0, 0], sizes = [8, 1], strides = [1, 1]} : vector<8x2xf32> to vector<8x1xf32>
      %13 = vector.extract_strided_slice %8 {offsets = [0, 1], sizes = [8, 1], strides = [1, 1]} : vector<8x2xf32> to vector<8x1xf32>
      %14 = vector.shape_cast %12 : vector<8x1xf32> to vector<8x1xf32>
      %15 = vector.broadcast %14 : vector<8x1xf32> to vector<8x128xf32>
      %16 = vector.shape_cast %13 : vector<8x1xf32> to vector<8x1xf32>
      %17 = vector.broadcast %16 : vector<8x1xf32> to vector<8x128xf32>
      %18 = arith.select %11, %15, %17 : vector<8x128xi1>, vector<8x128xf32>
      %c0_9 = arith.constant 0 : index
      %c0_10 = arith.constant 0 : index
      %19 = vector.load %arg4[%c0_9, %c0_10] : memref<1x128xf32, #tpu.memory_space<vmem>>, vector<1x128xf32>
      %20 = vector.broadcast %19 : vector<1x128xf32> to vector<8x128xf32>
      %21 = arith.mulf %18, %20 : vector<8x128xf32>
      %c0_11 = arith.constant 0 : index
      %c0_12 = arith.constant 0 : index
      %22 = vector.load %arg5[%c0_11, %c0_12] : memref<1x128xf32, #tpu.memory_space<vmem>>, vector<1x128xf32>
      %23 = vector.broadcast %22 : vector<1x128xf32> to vector<8x128xf32>
      %24 = arith.addf %21, %23 : vector<8x128xf32>
      %25 = math.sin %24 : vector<8x128xf32>
      %26 = arith.truncf %25 : vector<8x128xf32> to vector<8x128xbf16>
      %c0_13 = arith.constant 0 : index
      %c0_14 = arith.constant 0 : index
      %27 = vector.load %arg6[%c0_13, %c0_14] : memref<128x512xbf16, #tpu.memory_space<vmem>>, vector<128x512xbf16>
      %cst = arith.constant dense<0.000000e+00> : vector<8x512xf32>
      %28 = tpu.matmul %26, %27, %cst {dimension_numbers = #tpu.dot_dimension_numbers<[1], [0], [0], [1], [0, 0, 1, 1], [], []>} : vector<8x128xbf16>, vector<128x512xbf16>, vector<8x512xf32> -> vector<8x512xf32>
      %c0_15 = arith.constant 0 : index
      %c0_16 = arith.constant 0 : index
      %29 = vector.load %arg7[%c0_15, %c0_16] : memref<1x512xf32, #tpu.memory_space<vmem>>, vector<1x512xf32>
      %30 = vector.broadcast %29 : vector<1x512xf32> to vector<8x512xf32>
      %31 = arith.addf %28, %30 : vector<8x512xf32>
      %cst_17 = arith.constant 0.000000e+00 : f32
      %32 = vector.broadcast %cst_17 : f32 to vector<8x512xf32>
      %33 = arith.cmpf oge, %31, %32 : vector<8x512xf32>
      %cst_18 = arith.constant 2.000000e-01 : f32
      %34 = vector.broadcast %cst_18 : f32 to vector<8x512xf32>
      %35 = arith.mulf %34, %31 : vector<8x512xf32>
      %36 = arith.select %33, %31, %35 : vector<8x512xi1>, vector<8x512xf32>
      %cst_19 = arith.constant dense<0.000000e+00> : vector<8xf32>
      %37 = vector.multi_reduction <add>, %36, %cst_19 [1] : vector<8x512xf32> to vector<8xf32>
      %38 = vector.shape_cast %37 : vector<8xf32> to vector<8x1xf32>
      %cst_20 = arith.constant 5.120000e+02 : f32
      %39 = vector.broadcast %cst_20 : f32 to vector<8x1xf32>
      %40 = arith.divf %38, %39 : vector<8x1xf32>
      %41 = arith.mulf %36, %36 : vector<8x512xf32>
      %cst_21 = arith.constant dense<0.000000e+00> : vector<8xf32>
      %42 = vector.multi_reduction <add>, %41, %cst_21 [1] : vector<8x512xf32> to vector<8xf32>
      %43 = vector.shape_cast %42 : vector<8xf32> to vector<8x1xf32>
      %cst_22 = arith.constant 5.120000e+02 : f32
      %44 = vector.broadcast %cst_22 : f32 to vector<8x1xf32>
      %45 = arith.divf %43, %44 : vector<8x1xf32>
      %46 = vector.broadcast %40 : vector<8x1xf32> to vector<8x512xf32>
      %47 = arith.subf %36, %46 : vector<8x512xf32>
      %48 = arith.mulf %40, %40 : vector<8x1xf32>
      %49 = arith.subf %45, %48 : vector<8x1xf32>
      %cst_23 = arith.constant 9.99999974E-6 : f32
      %50 = vector.broadcast %cst_23 : f32 to vector<8x1xf32>
      %51 = arith.addf %49, %50 : vector<8x1xf32>
      %52 = math.rsqrt %51 : vector<8x1xf32>
      %53 = vector.broadcast %52 : vector<8x1xf32> to vector<8x512xf32>
      %54 = arith.mulf %47, %53 : vector<8x512xf32>
      %c0_24 = arith.constant 0 : index
      %c0_25 = arith.constant 0 : index
      %55 = vector.load %arg8[%c0_24, %c0_25] : memref<1x512xf32, #tpu.memory_space<vmem>>, vector<1x512xf32>
      %56 = vector.broadcast %55 : vector<1x512xf32> to vector<8x512xf32>
      %57 = arith.mulf %54, %56 : vector<8x512xf32>
      %c0_26 = arith.constant 0 : index
      %c0_27 = arith.constant 0 : index
      %58 = vector.load %arg9[%c0_26, %c0_27] : memref<1x512xf32, #tpu.memory_space<vmem>>, vector<1x512xf32>
      %59 = vector.broadcast %58 : vector<1x512xf32> to vector<8x512xf32>
      %60 = arith.addf %57, %59 : vector<8x512xf32>
      %61 = arith.truncf %60 : vector<8x512xf32> to vector<8x512xbf16>
      %c0_28 = arith.constant 0 : index
      %c0_29 = arith.constant 0 : index
      %62 = vector.load %arg10[%c0_28, %c0_29] : memref<512x256xbf16, #tpu.memory_space<vmem>>, vector<512x256xbf16>
      %cst_30 = arith.constant dense<0.000000e+00> : vector<8x256xf32>
      %63 = tpu.matmul %61, %62, %cst_30 {dimension_numbers = #tpu.dot_dimension_numbers<[1], [0], [0], [1], [0, 0, 1, 1], [], []>} : vector<8x512xbf16>, vector<512x256xbf16>, vector<8x256xf32> -> vector<8x256xf32>
      %c0_31 = arith.constant 0 : index
      %c0_32 = arith.constant 0 : index
      %64 = vector.load %arg11[%c0_31, %c0_32] : memref<1x256xf32, #tpu.memory_space<vmem>>, vector<1x256xf32>
      %65 = vector.broadcast %64 : vector<1x256xf32> to vector<8x256xf32>
      %66 = arith.addf %63, %65 : vector<8x256xf32>
      %cst_33 = arith.constant 0.000000e+00 : f32
      %67 = vector.broadcast %cst_33 : f32 to vector<8x256xf32>
      %68 = arith.cmpf oge, %66, %67 : vector<8x256xf32>
      %cst_34 = arith.constant 2.000000e-01 : f32
      %69 = vector.broadcast %cst_34 : f32 to vector<8x256xf32>
      %70 = arith.mulf %69, %66 : vector<8x256xf32>
      %71 = arith.select %68, %66, %70 : vector<8x256xi1>, vector<8x256xf32>
      %c0_35 = arith.constant 0 : index
      %c0_36 = arith.constant 0 : index
      %72 = vector.load %arg13[%c0_35, %c0_36] : memref<8x256xf32, #tpu.memory_space<vmem>>, vector<8x256xf32>
      tpu.vector_store %arg13[%c0_35, %c0_36], %71 {strides = array<i32>} : memref<8x256xf32, #tpu.memory_space<vmem>>, vector<8x256xf32>,
    } else {
    }
    %c0 = arith.constant 0 : index
    %c0_1 = arith.constant 0 : index
    %3 = vector.load %arg13[%c0, %c0_1] : memref<8x256xf32, #tpu.memory_space<vmem>>, vector<8x256xf32>
    %c0_2 = arith.constant 0 : index
    %c0_3 = arith.constant 0 : index
    %c0_4 = arith.constant 0 : index
    %c0_5 = arith.constant 0 : index
    %4 = vector.load %arg12[%c0_2, %c0_3, %c0_4, %c0_5] : memref<1x1x8x256xf32, #tpu.memory_space<vmem>>, vector<1x1x8x256xf32>
    %5 = vector.shape_cast %4 : vector<1x1x8x256xf32> to vector<8x256xf32>
    %6 = vector.shape_cast %3 : vector<8x256xf32> to vector<1x1x8x256xf32>
    tpu.vector_store %arg12[%c0_2, %c0_3, %c0_4, %c0_5], %6 {strides = array<i32>} : memref<1x1x8x256xf32, #tpu.memory_space<vmem>>, vector<1x1x8x256xf32>,
    return
  }
  func.func @transform_0(%arg0: i32, %arg1: i32, %arg2: i32) -> (i32, i32, i32) {
    %c0_i32 = arith.constant 0 : i32
    %c0_i32_0 = arith.constant 0 : i32
    return %arg0, %arg1, %c0_i32 : i32, i32, i32
  }
  func.func @transform_1(%arg0: i32, %arg1: i32, %arg2: i32) -> (i32, i32) {
    %c0_i32 = arith.constant 0 : i32
    %c0_i32_0 = arith.constant 0 : i32
    %c0_i32_1 = arith.constant 0 : i32
    return %c0_i32, %c0_i32_0 : i32, i32
  }
  func.func @transform_2(%arg0: i32, %arg1: i32, %arg2: i32) -> (i32, i32) {
    %c0_i32 = arith.constant 0 : i32
    %c0_i32_0 = arith.constant 0 : i32
    %c0_i32_1 = arith.constant 0 : i32
    return %c0_i32, %c0_i32_0 : i32, i32
  }
  func.func @transform_3(%arg0: i32, %arg1: i32, %arg2: i32) -> (i32, i32) {
    %c0_i32 = arith.constant 0 : i32
    %c0_i32_0 = arith.constant 0 : i32
    %c0_i32_1 = arith.constant 0 : i32
    return %c0_i32, %c0_i32_0 : i32, i32
  }
  func.func @transform_4(%arg0: i32, %arg1: i32, %arg2: i32) -> (i32, i32) {
    %c0_i32 = arith.constant 0 : i32
    %c0_i32_0 = arith.constant 0 : i32
    %c0_i32_1 = arith.constant 0 : i32
    return %c0_i32, %c0_i32_0 : i32, i32
  }
  func.func @transform_5(%arg0: i32, %arg1: i32, %arg2: i32) -> (i32, i32) {
    %c0_i32 = arith.constant 0 : i32
    %c0_i32_0 = arith.constant 0 : i32
    %c0_i32_1 = arith.constant 0 : i32
    return %c0_i32, %c0_i32_0 : i32, i32
  }
  func.func @transform_6(%arg0: i32, %arg1: i32, %arg2: i32) -> (i32, i32) {
    %c0_i32 = arith.constant 0 : i32
    %c0_i32_0 = arith.constant 0 : i32
    %c0_i32_1 = arith.constant 0 : i32
    return %c0_i32, %c0_i32_0 : i32, i32
  }
  func.func @transform_7(%arg0: i32, %arg1: i32, %arg2: i32) -> (i32, i32) {
    %c0_i32 = arith.constant 0 : i32
    %c0_i32_0 = arith.constant 0 : i32
    %c0_i32_1 = arith.constant 0 : i32
    return %c0_i32, %c0_i32_0 : i32, i32
  }
  func.func @transform_8(%arg0: i32, %arg1: i32, %arg2: i32) -> (i32, i32) {
    %c0_i32 = arith.constant 0 : i32
    %c0_i32_0 = arith.constant 0 : i32
    %c0_i32_1 = arith.constant 0 : i32
    return %c0_i32, %c0_i32_0 : i32, i32
  }
  func.func @transform_9(%arg0: i32, %arg1: i32, %arg2: i32) -> (i32, i32, i32, i32) {
    %c0_i32 = arith.constant 0 : i32
    %c0_i32_0 = arith.constant 0 : i32
    return %arg0, %arg2, %arg1, %c0_i32 : i32, i32, i32, i32
  }
}

</mosaic_0001>

<llo_original>
// kernel: dummy_enc_forward.1
$region0: #{dummy_enc_forward.1}
  #allocation0 [shape = 'u32[]', space=smem, size = 0x4, offset = 0x4, fixed_abs, tag = 'smem constant byte address 0x4 - core index']
  #allocation1 [shape = 'u32[72,128]{1,0:T(1,128)}', space=vmem, size = 0x9000, scoped, tag = 'internal scratch']
  #allocation2 [shape = 'f32[8,256]{1,0:T(8,128)}', space=vmem, size = 0x2000, scoped, tag = 'scratch operand']
  %s0 = inlined_call_operand.vmem [shape: f32[2,8,2], index: 0, kind: input, shape index: {}]
  %s1 = inlined_call_operand.vmem [shape: f32[1,128], index: 1, kind: input, shape index: {}]
  %s2 = inlined_call_operand.vmem [shape: f32[1,128], index: 2, kind: input, shape index: {}]
  %s3 = inlined_call_operand.hbm [shape: bf16[128,512], index: 3, kind: input, shape index: {}]
  %s4 = inlined_call_operand.vmem [shape: f32[1,512], index: 4, kind: input, shape index: {}]
  %s5 = inlined_call_operand.vmem [shape: f32[1,512], index: 5, kind: input, shape index: {}]
  %s6 = inlined_call_operand.vmem [shape: f32[1,512], index: 6, kind: input, shape index: {}]
  %s7 = inlined_call_operand.hbm [shape: bf16[512,256], index: 7, kind: input, shape index: {}]
  %s8 = inlined_call_operand.vmem [shape: f32[1,256], index: 8, kind: input, shape index: {}]
  %s9 = inlined_call_operand.hbm [shape: f32[2,2,8,256], index: 9, kind: output, shape index: {}]
  %s10 = sld [smem:[#allocation0]]
  $region81: #{dummy_enc_forward.1} parent=0
    _
  %s12 = ssub.s32 1, %s10
  %s13 = scalar_select 0, %s12, %s10
  $region1: #{dummy_enc_forward.1} parent=0
    #allocation3 [shape = 'u8[131072]{0}', space=vmem, size = 0x20000, scoped, tag = 'input window, operand 3, single buffered']
    #allocation4 [shape = 's32[2]{0}', space=sflag, size = 0x8, scoped, tag = 'scoped memory for dummy_enc_forward.1']
    #allocation5 [shape = 's32[2]{0}', space=sflag, size = 0x8, scoped, tag = 'scoped memory for dummy_enc_forward.1']
    #allocation6 [shape = 'u8[262144]{0}', space=vmem, size = 0x40000, scoped, tag = 'input window, operand 7, single buffered']
    #allocation7 [shape = 's32[1]{0}', space=sflag, size = 0x4, scoped, tag = 'scoped memory for dummy_enc_forward.1']
    #allocation8 [shape = 'u8[16384]{0}', space=vmem, size = 0x4000, scoped, tag = 'output window, operand 0']
    %14 = vsyncpa [#allocation4], 0
    %15 = vsyncpa [#allocation7], 0
    %16 = vsyncpa [#allocation5], 0
    %s17 = scalar_lea.sflag [#allocation5], 1
    %18 = vsyncpa %s17, 0
    loop: start=0, step=1, limit=6
    $region2: #{dummy_enc_forward.1} parent=1 // loop_pre_header
      _
    $region3: #{dummy_enc_forward.1} parent=1 // loop_header
      %s20 = sphi 0, %s24
      %p21 = scmp.ge.s32.totalorder %s20, 6
      %s27 = sphi 0, %s46
      %s28 = sphi 0, %s42
      %s29 = sphi 0, %s38
      %s30 = sphi 0, %s27
      %s31 = sphi 0, %s28
      %s32 = sphi 0, %s29
      %s33 = sphi 0, %s30
      %s34 = sphi 0, %s31
      %s35 = sphi 0, %s32
      %s51 = sphi 0, %s53
      %s54 = sphi 0, %s51
      %s55 = sphi 0, %s54
      %s71 = sphi 0, %s55
      %s75 = sphi 0, %s75
      %s77 = sphi 0, %s75
      %s78 = sphi 0, %s77
      %s92 = sphi 0, %s78
      %s96 = sphi 0, %s96
      %s98 = sphi 0, %s96
      %s99 = sphi 0, %s98
      %s113 = sphi 0, %s99
      %s117 = sphi 0, %s117
      %s119 = sphi 0, %s117
      %s120 = sphi 0, %s119
      %s134 = sphi 0, %s120
      %s138 = sphi 0, %s138
      %s140 = sphi 0, %s138
      %s141 = sphi 0, %s140
      %s155 = sphi 0, %s141
      %s159 = sphi 0, %s159
      %s161 = sphi 0, %s159
      %s162 = sphi 0, %s161
      %s176 = sphi 0, %s162
      %s180 = sphi 0, %s180
      %s182 = sphi 0, %s180
      %s183 = sphi 0, %s182
      %s197 = sphi 0, %s183
      %s201 = sphi 0, %s201
      %s203 = sphi 0, %s201
      %s204 = sphi 0, %s203
      %s218 = sphi 0, %s204
      %s222 = sphi 0, %s222
      %s224 = sphi 0, %s222
      %s225 = sphi 0, %s224
      %s239 = sphi 0, %s225
      %s249 = sphi 0, %s251
      %s252 = sphi 0, %s249
      %s253 = sphi 0, %s252
      %s269 = sphi 0, %s253
    $region4: #{dummy_enc_forward.1} parent=1 // loop_header_branch
      %23 = sbr.rel (%p21) target = $region8
    $region5: #{dummy_enc_forward.1} parent=1 // loop_body
      %s25 = ssub.s32 %s20, 1
      %s26 = ssub.s32 %s20, 2
      %s36 = sadd.s32 1, %s29
      %p37 = scmp.ge.s32.totalorder %s36, 2
      %s38 = scalar_select %p37, 0, %s36
      %s39 = sadd.s32 1, %s28
      %s40 = scalar_select %p37, %s39, %s28
      %p41 = scmp.ge.s32.totalorder %s40, 1
      %s42 = scalar_select %p41, 0, %s40
      %s43 = sadd.s32 1, %s27
      %s44 = scalar_select %p41, %s43, %s27
      %p45 = scmp.ge.s32.totalorder %s44, 2
      %s46 = scalar_select %p45, 0, %s44
      %s47 = ssub.s32 %s27, %s46
      %s48 = ssub.s32 %s28, %s42
      %s49 = sor.u32 %s47, %s48
      %p50 = scmp.eq.s32.totalorder %s49, 0
      %s52 = sadd.s32 %s51, 1
      %s53 = scalar_select %p50, %s51, %s52
      %p56 = pneg %p50
      %p57 = scmp.eq.s32.totalorder %s20, 3
      %p58 = por %p56, %p57
      %p59 = scmp.ne.s32.totalorder %s51, %s54
      %p60 = scmp.eq.s32.totalorder %s20, 0
      %p61 = por %p59, %p60
      %p62 = scmp.ne.s32.totalorder %s51, %s54
      %p63 = scmp.eq.s32.totalorder %s25, 3
      %p64 = por %p62, %p63
      %p65 = scmp.ne.s32.totalorder %s54, %s55
      %p66 = scmp.eq.s32.totalorder %s25, 0
      %p67 = por %p65, %p66
      %p68 = scmp.ne.s32.totalorder %s54, %s55
      %p69 = scmp.eq.s32.totalorder %s26, 3
      %p70 = por %p68, %p69
      %p72 = scmp.ne.s32.totalorder %s55, %s71
      %p73 = scmp.eq.s32.totalorder %s26, 0
      %p74 = por %p72, %p73
      %s76 = sadd.s32 %s75, 1
      %p79 = scmp.eq.s32.totalorder %s20, 3
      %p80 = scmp.ne.s32.totalorder %s75, %s77
      %p81 = scmp.eq.s32.totalorder %s20, 0
      %p82 = por %p80, %p81
      %p83 = scmp.ne.s32.totalorder %s75, %s77
      %p84 = scmp.eq.s32.totalorder %s25, 3
      %p85 = por %p83, %p84
      %p86 = scmp.ne.s32.totalorder %s77, %s78
      %p87 = scmp.eq.s32.totalorder %s25, 0
      %p88 = por %p86, %p87
      %p89 = scmp.ne.s32.totalorder %s77, %s78
      %p90 = scmp.eq.s32.totalorder %s26, 3
      %p91 = por %p89, %p90
      %p93 = scmp.ne.s32.totalorder %s78, %s92
      %p94 = scmp.eq.s32.totalorder %s26, 0
      %p95 = por %p93, %p94
      %s97 = sadd.s32 %s96, 1
      %p100 = scmp.eq.s32.totalorder %s20, 3
      %p101 = scmp.ne.s32.totalorder %s96, %s98
      %p102 = scmp.eq.s32.totalorder %s20, 0
      %p103 = por %p101, %p102
      %p104 = scmp.ne.s32.totalorder %s96, %s98
      %p105 = scmp.eq.s32.totalorder %s25, 3
      %p106 = por %p104, %p105
      %p107 = scmp.ne.s32.totalorder %s98, %s99
      %p108 = scmp.eq.s32.totalorder %s25, 0
      %p109 = por %p107, %p108
      %p110 = scmp.ne.s32.totalorder %s98, %s99
      %p111 = scmp.eq.s32.totalorder %s26, 3
      %p112 = por %p110, %p111
      %p114 = scmp.ne.s32.totalorder %s99, %s113
      %p115 = scmp.eq.s32.totalorder %s26, 0
      %p116 = por %p114, %p115
      %s118 = sadd.s32 %s117, 1
      %p121 = scmp.eq.s32.totalorder %s20, 3
      %p122 = scmp.ne.s32.totalorder %s117, %s119
      %p123 = scmp.eq.s32.totalorder %s20, 0
      %p124 = por %p122, %p123
      %p125 = scmp.ne.s32.totalorder %s117, %s119
      %p126 = scmp.eq.s32.totalorder %s25, 3
      %p127 = por %p125, %p126
      %p128 = scmp.ne.s32.totalorder %s119, %s120
      %p129 = scmp.eq.s32.totalorder %s25, 0
      %p130 = por %p128, %p129
      %p131 = scmp.ne.s32.totalorder %s119, %s120
      %p132 = scmp.eq.s32.totalorder %s26, 3
      %p133 = por %p131, %p132
      %p135 = scmp.ne.s32.totalorder %s120, %s134
      %p136 = scmp.eq.s32.totalorder %s26, 0
      %p137 = por %p135, %p136
      %s139 = sadd.s32 %s138, 1
      %p142 = scmp.eq.s32.totalorder %s20, 3
      %p143 = scmp.ne.s32.totalorder %s138, %s140
      %p144 = scmp.eq.s32.totalorder %s20, 0
      %p145 = por %p143, %p144
      %p146 = scmp.ne.s32.totalorder %s138, %s140
      %p147 = scmp.eq.s32.totalorder %s25, 3
      %p148 = por %p146, %p147
      %p149 = scmp.ne.s32.totalorder %s140, %s141
      %p150 = scmp.eq.s32.totalorder %s25, 0
      %p151 = por %p149, %p150
      %p152 = scmp.ne.s32.totalorder %s140, %s141
      %p153 = scmp.eq.s32.totalorder %s26, 3
      %p154 = por %p152, %p153
      %p156 = scmp.ne.s32.totalorder %s141, %s155
      %p157 = scmp.eq.s32.totalorder %s26, 0
      %p158 = por %p156, %p157
      %s160 = sadd.s32 %s159, 1
      %p163 = scmp.eq.s32.totalorder %s20, 3
      %p164 = scmp.ne.s32.totalorder %s159, %s161
      %p165 = scmp.eq.s32.totalorder %s20, 0
      %p166 = por %p164, %p165
      %p167 = scmp.ne.s32.totalorder %s159, %s161
      %p168 = scmp.eq.s32.totalorder %s25, 3
      %p169 = por %p167, %p168
      %p170 = scmp.ne.s32.totalorder %s161, %s162
      %p171 = scmp.eq.s32.totalorder %s25, 0
      %p172 = por %p170, %p171
      %p173 = scmp.ne.s32.totalorder %s161, %s162
      %p174 = scmp.eq.s32.totalorder %s26, 3
      %p175 = por %p173, %p174
      %p177 = scmp.ne.s32.totalorder %s162, %s176
      %p178 = scmp.eq.s32.totalorder %s26, 0
      %p179 = por %p177, %p178
      %s181 = sadd.s32 %s180, 1
      %p184 = scmp.eq.s32.totalorder %s20, 3
      %p185 = scmp.ne.s32.totalorder %s180, %s182
      %p186 = scmp.eq.s32.totalorder %s20, 0
      %p187 = por %p185, %p186
      %p188 = scmp.ne.s32.totalorder %s180, %s182
      %p189 = scmp.eq.s32.totalorder %s25, 3
      %p190 = por %p188, %p189
      %p191 = scmp.ne.s32.totalorder %s182, %s183
      %p192 = scmp.eq.s32.totalorder %s25, 0
      %p193 = por %p191, %p192
      %p194 = scmp.ne.s32.totalorder %s182, %s183
      %p195 = scmp.eq.s32.totalorder %s26, 3
      %p196 = por %p194, %p195
      %p198 = scmp.ne.s32.totalorder %s183, %s197
      %p199 = scmp.eq.s32.totalorder %s26, 0
      %p200 = por %p198, %p199
      %s202 = sadd.s32 %s201, 1
      %p205 = scmp.eq.s32.totalorder %s20, 3
      %p206 = scmp.ne.s32.totalorder %s201, %s203
      %p207 = scmp.eq.s32.totalorder %s20, 0
      %p208 = por %p206, %p207
      %p209 = scmp.ne.s32.totalorder %s201, %s203
      %p210 = scmp.eq.s32.totalorder %s25, 3
      %p211 = por %p209, %p210
      %p212 = scmp.ne.s32.totalorder %s203, %s204
      %p213 = scmp.eq.s32.totalorder %s25, 0
      %p214 = por %p212, %p213
      %p215 = scmp.ne.s32.totalorder %s203, %s204
      %p216 = scmp.eq.s32.totalorder %s26, 3
      %p217 = por %p215, %p216
      %p219 = scmp.ne.s32.totalorder %s204, %s218
      %p220 = scmp.eq.s32.totalorder %s26, 0
      %p221 = por %p219, %p220
      %s223 = sadd.s32 %s222, 1
      %p226 = scmp.eq.s32.totalorder %s20, 3
      %p227 = scmp.ne.s32.totalorder %s222, %s224
      %p228 = scmp.eq.s32.totalorder %s20, 0
      %p229 = por %p227, %p228
      %p230 = scmp.ne.s32.totalorder %s222, %s224
      %p231 = scmp.eq.s32.totalorder %s25, 3
      %p232 = por %p230, %p231
      %p233 = scmp.ne.s32.totalorder %s224, %s225
      %p234 = scmp.eq.s32.totalorder %s25, 0
      %p235 = por %p233, %p234
      %p236 = scmp.ne.s32.totalorder %s224, %s225
      %p237 = scmp.eq.s32.totalorder %s26, 3
      %p238 = por %p236, %p237
      %p240 = scmp.ne.s32.totalorder %s225, %s239
      %p241 = scmp.eq.s32.totalorder %s26, 0
      %p242 = por %p240, %p241
      %s243 = ssub.s32 %s27, %s46
      %s244 = ssub.s32 %s29, %s38
      %s245 = sor.u32 %s243, %s244
      %s246 = ssub.s32 %s28, %s42
      %s247 = sor.u32 %s245, %s246
      %p248 = scmp.eq.s32.totalorder %s247, 0
      %s250 = sadd.s32 %s249, 1
      %s251 = scalar_select %p248, %s249, %s250
      %p254 = pneg %p248
      %p255 = scmp.eq.s32.totalorder %s20, 3
      %p256 = por %p254, %p255
      %p257 = scmp.ne.s32.totalorder %s249, %s252
      %p258 = scmp.eq.s32.totalorder %s20, 0
      %p259 = por %p257, %p258
      %p260 = scmp.ne.s32.totalorder %s249, %s252
      %p261 = scmp.eq.s32.totalorder %s25, 3
      %p262 = por %p260, %p261
      %p263 = scmp.ne.s32.totalorder %s252, %s253
      %p264 = scmp.eq.s32.totalorder %s25, 0
      %p265 = por %p263, %p264
      %p266 = scmp.ne.s32.totalorder %s252, %s253
      %p267 = scmp.eq.s32.totalorder %s26, 3
      %p268 = por %p266, %p267
      %p270 = scmp.ne.s32.totalorder %s253, %s269
      %p271 = scmp.eq.s32.totalorder %s26, 0
      %p272 = por %p270, %p271
      %p273 = scmp.le.s32.totalorder 1, %s20
      %p274 = scmp.lt.s32.totalorder %s20, 5
      %p275 = pnand %p273, %p274
      %p276 = pneg %p275
      // Predicated region
      $region9: #{dummy_enc_forward.1} parent=5 // pred_check
        _
      $region10: #{dummy_enc_forward.1} parent=5 // pred_check_branch
        %278 = sbr.rel (%p275) target = $region12
      $region11: #{dummy_enc_forward.1} parent=5 // pred_region
        %s279 = ssub.s32 %s20, 1
        // Predicated region
        $region13: #{dummy_enc_forward.1} parent=11 // pred_check
          %p280 = pneg %p88
        $region14: #{dummy_enc_forward.1} parent=11 // pred_check_branch
          %282 = sbr.rel (%p280) target = $region16
        $region15: #{dummy_enc_forward.1} parent=11 // pred_region
          _
        $region16: #{dummy_enc_forward.1} parent=11 // pred_fallthru
          _
        // Predicated region
        $region17: #{dummy_enc_forward.1} parent=11 // pred_check
          %p283 = pneg %p109
        $region18: #{dummy_enc_forward.1} parent=11 // pred_check_branch
          %285 = sbr.rel (%p283) target = $region20
        $region19: #{dummy_enc_forward.1} parent=11 // pred_region
          _
        $region20: #{dummy_enc_forward.1} parent=11 // pred_fallthru
          _
        // Predicated region
        $region21: #{dummy_enc_forward.1} parent=11 // pred_check
          %p286 = pneg %p130
        $region22: #{dummy_enc_forward.1} parent=11 // pred_check_branch
          %288 = sbr.rel (%p286) target = $region24
        $region23: #{dummy_enc_forward.1} parent=11 // pred_region
          %290 = vsyncadd [#allocation4], 0
          %s291 = sshll.u32 %s3, 4
          %s292 = int_to_ptr.hbm [resolvable:$true] %s291
          %s293 = sshll.u32 [#allocation3], 4
          %s294 = int_to_ptr.vmem [resolvable:$true] %s293
          %299 = dma.hbm_to_vmem [thread:$0]  %s292, 4096, %s294, [#allocation4], 256, 256, 16
        $region24: #{dummy_enc_forward.1} parent=11 // pred_fallthru
          _
        // Predicated region
        $region25: #{dummy_enc_forward.1} parent=11 // pred_check
          %p300 = pneg %p151
        $region26: #{dummy_enc_forward.1} parent=11 // pred_check_branch
          %302 = sbr.rel (%p300) target = $region28
        $region27: #{dummy_enc_forward.1} parent=11 // pred_region
          _
        $region28: #{dummy_enc_forward.1} parent=11 // pred_fallthru
          _
        // Predicated region
        $region29: #{dummy_enc_forward.1} parent=11 // pred_check
          %p303 = pneg %p172
        $region30: #{dummy_enc_forward.1} parent=11 // pred_check_branch
          %305 = sbr.rel (%p303) target = $region32
        $region31: #{dummy_enc_forward.1} parent=11 // pred_region
          _
        $region32: #{dummy_enc_forward.1} parent=11 // pred_fallthru
          _
        // Predicated region
        $region33: #{dummy_enc_forward.1} parent=11 // pred_check
          %p306 = pneg %p193
        $region34: #{dummy_enc_forward.1} parent=11 // pred_check_branch
          %308 = sbr.rel (%p306) target = $region36
        $region35: #{dummy_enc_forward.1} parent=11 // pred_region
          _
        $region36: #{dummy_enc_forward.1} parent=11 // pred_fallthru
          _
        // Predicated region
        $region37: #{dummy_enc_forward.1} parent=11 // pred_check
          %p309 = pneg %p214
        $region38: #{dummy_enc_forward.1} parent=11 // pred_check_branch
          %311 = sbr.rel (%p309) target = $region40
        $region39: #{dummy_enc_forward.1} parent=11 // pred_region
          %313 = vsyncadd [#allocation7], 0
          %s314 = sshll.u32 %s7, 4
          %s315 = int_to_ptr.hbm [resolvable:$true] %s314
          %s316 = sshll.u32 [#allocation6], 4
          %s317 = int_to_ptr.vmem [resolvable:$true] %s316
          %322 = dma.hbm_to_vmem [thread:$0]  %s315, 8192, %s317, [#allocation7], 128, 128, 8
        $region40: #{dummy_enc_forward.1} parent=11 // pred_fallthru
          _
        // Predicated region
        $region41: #{dummy_enc_forward.1} parent=11 // pred_check
          %p323 = pneg %p235
        $region42: #{dummy_enc_forward.1} parent=11 // pred_check_branch
          %325 = sbr.rel (%p323) target = $region44
        $region43: #{dummy_enc_forward.1} parent=11 // pred_region
          _
        $region44: #{dummy_enc_forward.1} parent=11 // pred_fallthru
          _
      $region12: #{dummy_enc_forward.1} parent=5 // pred_fallthru
        _
      %p326 = scmp.lt.s32.totalorder %s20, 4
      // Predicated region
      $region45: #{dummy_enc_forward.1} parent=5 // pred_check
        %p327 = pneg %p326
      $region46: #{dummy_enc_forward.1} parent=5 // pred_check_branch
        %329 = sbr.rel (%p327) target = $region48
      $region47: #{dummy_enc_forward.1} parent=5 // pred_region
        // Predicated region
        $region49: #{dummy_enc_forward.1} parent=47 // pred_check
          %p330 = pneg %p61
        $region50: #{dummy_enc_forward.1} parent=47 // pred_check_branch
          %332 = sbr.rel (%p330) target = $region52
        $region51: #{dummy_enc_forward.1} parent=47 // pred_region
          %p333 = scmp.lt.s32.totalorder %s27, 1
          %s334 = scalar_select %p333, %s27, 1
          %p335 = scmp.lt.s32.totalorder %s28, 0
          %s336 = scalar_select %p335, %s28, 0
          %s337 = sadd.s32 %s336, %s334
          %s338 = smul.addr %s337, 8
          %s339 = scalar_lea.vmem %s0, %s338
        $region52: #{dummy_enc_forward.1} parent=47 // pred_fallthru
          _
      $region48: #{dummy_enc_forward.1} parent=5 // pred_fallthru
        _
      %p340 = scmp.le.s32.totalorder 1, %s20
      %p341 = scmp.lt.s32.totalorder %s20, 5
      %p342 = pnand %p340, %p341
      %p343 = pneg %p342
      // Predicated region
      $region53: #{dummy_enc_forward.1} parent=5 // pred_check
        _
      $region54: #{dummy_enc_forward.1} parent=5 // pred_check_branch
        %345 = sbr.rel (%p342) target = $region56
      $region55: #{dummy_enc_forward.1} parent=5 // pred_region
        %s346 = ssub.s32 %s20, 1
        // Predicated region
        $region57: #{dummy_enc_forward.1} parent=55 // pred_check
          %p347 = pneg %p130
        $region58: #{dummy_enc_forward.1} parent=55 // pred_check_branch
          %349 = sbr.rel (%p347) target = $region60
        $region59: #{dummy_enc_forward.1} parent=55 // pred_region
          %351 = dma.done [#allocation4], 4096
        $region60: #{dummy_enc_forward.1} parent=55 // pred_fallthru
          _
        // Predicated region
        $region61: #{dummy_enc_forward.1} parent=55 // pred_check
          %p352 = pneg %p214
        $region62: #{dummy_enc_forward.1} parent=55 // pred_check_branch
          %354 = sbr.rel (%p352) target = $region64
        $region63: #{dummy_enc_forward.1} parent=55 // pred_region
          %356 = dma.done [#allocation7], 8192
        $region64: #{dummy_enc_forward.1} parent=55 // pred_fallthru
          _
        %p357 = scmp.lt.s32.totalorder %s30, 1
        %s358 = scalar_select %p357, %s30, 1
        %p359 = scmp.lt.s32.totalorder %s31, 0
        %s360 = scalar_select %p359, %s31, 0
        %s361 = sadd.s32 %s360, %s358
        %s362 = smul.addr %s361, 8
        %s363 = scalar_lea.vmem %s0, %s362
        %p364 = pneg %p67
        %p365 = pneg %p64
        %p366 = pneg %p88
        %p367 = pneg %p85
        %p368 = pneg %p109
        %p369 = pneg %p106
        %p370 = pneg %p130
        %p371 = pneg %p127
        %p372 = pneg %p151
        %p373 = pneg %p148
        %p374 = pneg %p172
        %p375 = pneg %p169
        %p376 = pneg %p193
        %p377 = pneg %p190
        %p378 = pneg %p214
        %p379 = pneg %p211
        %p380 = pneg %p235
        %p381 = pneg %p232
        %p382 = pneg %p265
        %p383 = pneg %p262
        %s384 = sand.u32 %s252, 1
        %s385 = scalar_lea.sflag [#allocation5], %s384
        %s386 = sand.u32 %s252, 1
        %s387 = smul.addr %s386, 16
        %s388 = scalar_lea.vmem [#allocation8], %s387
        %p389 = scmp.lt.s32.totalorder %s30, 1
        %s390 = scalar_select %p389, %s30, 1
        %p391 = scmp.lt.s32.totalorder %s31, 0
        %s392 = scalar_select %p391, %s31, 0
        %s393 = sadd.s32 %s392, %s390
        %s394 = smul.addr %s393, 8
        %s395 = scalar_lea.vmem %s0, %s394
        %p396 = scmp.eq.s32.totalorder %s32, 0
        // Predicated region
        $region65: #{dummy_enc_forward.1} parent=55 // pred_check
          %p397 = pneg %p396
        $region66: #{dummy_enc_forward.1} parent=55 // pred_check_branch
          %399 = sbr.rel (%p397) target = $region68
        $region67: #{dummy_enc_forward.1} parent=55 // pred_region
          %v400 = vld [vmem:[%s395] sm:$0xff]
          %v401 = vlaneseq
          %v402 = vand.u32 %v401, 127
          %vm403 = vcmp.lt.s32.totalorder %v402, 64
          %405 = vset.pattern.permute.xlu0 0
          %406 = vperm.xlu0 %405, %v400
          %v407 = vpop.permute.xlu0 %406
          %409 = vset.pattern.permute.xlu0 1
          %410 = vperm.xlu0 %409, %v400
          %v411 = vpop.permute.xlu0 %410
          %v413 = vsel %vm403, %v407, %v411
          %v414 = vld [vmem:[%s1] sm:$0x1]
          %v416 = vperm.slane %v414, 0
          %v418 = vmul.f32 %v413, %v416
          %v419 = vld [vmem:[%s2] sm:$0x1]
          %v421 = vperm.slane %v419, 0
          %v423 = vadd.f32 %v418, %v421
          %v424 = vand.u32 2147483647, %v423
          %vm425 = vcmp.le.f32.partialorder %v424, 0.7853982
          %vm426 = vcmp.lt.s32.totalorder %v423, 0
          %v427 = vand.u32 %v423, 2139095040
          %v428 = vshrl.u32 %v427, 23
          %v429 = vsub.s32 %v428, 127
          %v430 = vand.u32 2147483647, %v423
          %v431 = vand.u32 %v430, 8388607
          %v432 = vor.u32 %v431, 8388608
          %v433 = vsub.s32 0, %v432
          %v434 = vadd.s32 %v429, 1
          %vm435 = vcmp.gt.s32.totalorder %v434, 0
          %v436 = vsel %vm435, %v434, 0
          %v437 = vshrl.u32 %v436, 5
          %v438 = vand.u32 %v436, 31
          %v439 = vsub.s32 32, %v438
          %v440 = vshrl.u32 683565275, %v439
          %v441 = vshll.u32 683565275, %v438
          %v442 = vshrl.u32 2475754826, %v439
          %v443 = vor.u32 %v441, %v442
          %v444 = vshll.u32 2475754826, %v438
          %v445 = vshrl.u32 2131351028, %v439
          %v446 = vor.u32 %v444, %v445
          %v447 = vshll.u32 2131351028, %v438
          %v448 = vshrl.u32 2102212464, %v439
          %v449 = vor.u32 %v447, %v448
          %v450 = vshll.u32 2102212464, %v438
          %v451 = vshrl.u32 920167782, %v439
          %v452 = vor.u32 %v450, %v451
          %v453 = vshll.u32 920167782, %v438
          %v454 = vshrl.u32 1326507024, %v439
          %v455 = vor.u32 %v453, %v454
          %vm456 = vcmp.lt.s32.totalorder %v437, 1
          %vm457 = vcmp.lt.s32.totalorder %v437, 2
          %vm458 = vcmp.lt.s32.totalorder %v437, 3
          %vm459 = vcmp.lt.s32.totalorder %v437, 4
          %v460 = vsel %vm456, %v440, %v443
          %v461 = vsel %vm459, %v449, 2102212464
          %v462 = vsel %vm458, %v446, %v461
          %v463 = vsel %vm457, %v460, %v462
          %v464 = vsel %vm456, %v443, %v446
          %v465 = vsel %vm459, %v452, 920167782
          %v466 = vsel %vm458, %v449, %v465
          %v467 = vsel %vm457, %v464, %v466
          %v468 = vsel %vm456, %v446, %v449
          %v469 = vsel %vm459, %v455, 1326507024
          %v470 = vsel %vm458, %v452, %v469
          %v471 = vsel %vm457, %v468, %v470
          %v472 = vshll.u32 %v432, 8
          %v473 = vand.u32 %v472, 65535
          %v474 = vshrl.u32 %v472, 16
          %v475 = vand.u32 %v471, 65535
          %v476 = vshrl.u32 %v471, 16
          %v477 = vmul.u32 %v473, %v475
          %v478 = vmul.u32 %v473, %v476
          %v479 = vmul.u32 %v474, %v475
          %v480 = vmul.u32 %v474, %v476
          %v481 = vshll.u32 %v478, 16
          %v482 = vshrl.u32 %v478, 16
          %v483 = vshll.u32 %v479, 16
          %v484 = vshrl.u32 %v479, 16
          %vm485 = vc.u32 %v477, %v481
          %v486 = vsel %vm485, 1, 0
          %v487 = vadd.s32 %v477, %v481
          %v488 = vadd.s32 %v480, %v486
          %vm489 = vc.u32 %v487, %v483
          %v490 = vsel %vm489, 1, 0
          %v491 = vadd.s32 %v487, %v483
          %v492 = vadd.s32 %v488, %v490
          %v493 = vadd.s32 %v492, %v482
          %v494 = vadd.s32 %v493, %v484
          %v495 = vand.u32 %v472, 65535
          %v496 = vshrl.u32 %v472, 16
          %v497 = vand.u32 %v467, 65535
          %v498 = vshrl.u32 %v467, 16
          %v499 = vmul.u32 %v495, %v497
          %v500 = vmul.u32 %v495, %v498
          %v501 = vmul.u32 %v496, %v497
          %v502 = vmul.u32 %v496, %v498
          %v503 = vshll.u32 %v500, 16
          %v504 = vshrl.u32 %v500, 16
          %v505 = vshll.u32 %v501, 16
          %v506 = vshrl.u32 %v501, 16
          %vm507 = vc.u32 %v499, %v503
          %v508 = vsel %vm507, 1, 0
          %v509 = vadd.s32 %v499, %v503
          %v510 = vadd.s32 %v502, %v508
          %vm511 = vc.u32 %v509, %v505
          %v512 = vsel %vm511, 1, 0
          %v513 = vadd.s32 %v509, %v505
          %v514 = vadd.s32 %v510, %v512
          %v515 = vadd.s32 %v514, %v504
          %v516 = vadd.s32 %v515, %v506
          %v517 = vmul.u32 %v472, %v463
          %v518 = vadd.s32 %v494, %v513
          %vm519 = vc.u32 %v494, %v513
          %v520 = vadd.s32 %v516, 1
          %v521 = vsel %vm519, %v520, %v516
          %v522 = vadd.s32 %v517, %v521
          %v523 = vadd.s32 %v522, 536870912
          %v524 = vshrl.u32 %v523, 30
          %v525 = vshll.u32 %v524, 30
          %v526 = vsub.s32 %v522, %v525
          %vm527 = vcmp.lt.s32.totalorder %v526, 0
          %v528 = vsub.s32 0, %v526
          %v529 = vsel %vm527, %v528, %v526
          %v530 = vclz %v529
          %v531 = vsub.s32 %v530, 2
          %vm532 = vcmp.gt.s32.totalorder 0, %v531
          %v533 = vsel %vm532, 0, %v531
          %v534 = vsub.s32 32, %v533
          %v535 = vshll.u32 %v526, %v533
          %v536 = vshrl.u32 %v518, %v534
          %v537 = vor.u32 %v535, %v536
          %v538 = vsub.s32 4294967266, %v533
          %v539 = vadd.s32 %v538, 127
          %v540 = vshll.u32 %v539, 23
          %v541 = vor.u32 4788187, %v540
          %v542 = vand.u32 2147483647, %v541
          %v544 = vcvt.s32.f32 %v537
          %v545 = vmul.f32 %v544, %v542
          %v546 = vxor.u32 %v545, 2147483648
          %v547 = vsel %vm426, %v546, %v545
          %v548 = vsub.s32 4, %v524
          %v549 = vsel %vm426, %v548, %v524
          %v550 = vsel %vm425, %v423, %v547
          %v551 = vsel %vm425, 0, %v549
          %v552 = vmul.f32 %v550, %v550
          %v553 = vmul.f32 %v552, -0.001358992
          %v554 = vadd.f32 %v553, 0.041655596
          %v555 = vmul.f32 %v552, %v554
          %v556 = vadd.f32 %v555, -0.4999988
          %v557 = vmul.f32 %v552, %v556
          %v558 = vadd.f32 1.0, %v557
          %v559 = vmul.f32 %v550, %v550
          %v560 = vmul.f32 %v559, -0.00019511016
          %v561 = vadd.f32 %v560, 0.008332121
          %v562 = vmul.f32 %v559, %v561
          %v563 = vadd.f32 %v562, -0.16666654
          %v564 = vmul.f32 %v559, %v563
          %v565 = vadd.f32 %v564, 1.0
          %v566 = vmul.f32 %v565, %v550
          %vm567 = vweird.f32 %v423
          %v568 = vadd.s32 %v551, 3
          %v569 = vand.u32 %v568, 3
          %vm570 = vcmp.lt.s32.totalorder %v569, 2
          %vm571 = vcmp.eq.s32.totalorder %v569, 0
          %v572 = vxor.u32 %v566, 2147483648
          %v573 = vsel %vm571, %v558, %v572
          %vm574 = vcmp.eq.s32.totalorder %v569, 2
          %v575 = vxor.u32 %v558, 2147483648
          %v576 = vsel %vm574, %v575, %v566
          %v577 = vsel %vm570, %v573, %v576
          %v578 = vsel %vm567, nan, %v577
          %v579 = vpack.c.bf16 %v578, %v578
          %v580 = vld [vmem:[#allocation3] sm:$0xff]
          %v581 = vld [vmem:[#allocation3 + $0x8] sm:$0xff]
          %v582 = vld [vmem:[#allocation3 + $0x10] sm:$0xff]
          %v583 = vld [vmem:[#allocation3 + $0x18] sm:$0xff]
          %v584 = vld [vmem:[#allocation3 + $0x20] sm:$0xff]
          %v585 = vld [vmem:[#allocation3 + $0x28] sm:$0xff]
          %v586 = vld [vmem:[#allocation3 + $0x30] sm:$0xff]
          %v587 = vld [vmem:[#allocation3 + $0x38] sm:$0xff]
          %v588 = vld [vmem:[#allocation3 + $0x40] sm:$0xff]
          %v589 = vld [vmem:[#allocation3 + $0x48] sm:$0xff]
          %v590 = vld [vmem:[#allocation3 + $0x50] sm:$0xff]
          %v591 = vld [vmem:[#allocation3 + $0x58] sm:$0xff]
          %v592 = vld [vmem:[#allocation3 + $0x60] sm:$0xff]
          %v593 = vld [vmem:[#allocation3 + $0x68] sm:$0xff]
          %v594 = vld [vmem:[#allocation3 + $0x70] sm:$0xff]
          %v595 = vld [vmem:[#allocation3 + $0x78] sm:$0xff]
          %v596 = vld [vmem:[#allocation3 + $0x80] sm:$0xff]
          %v597 = vld [vmem:[#allocation3 + $0x88] sm:$0xff]
          %v598 = vld [vmem:[#allocation3 + $0x90] sm:$0xff]
          %v599 = vld [vmem:[#allocation3 + $0x98] sm:$0xff]
          %v600 = vld [vmem:[#allocation3 + $0xa0] sm:$0xff]
          %v601 = vld [vmem:[#allocation3 + $0xa8] sm:$0xff]
          %v602 = vld [vmem:[#allocation3 + $0xb0] sm:$0xff]
          %v603 = vld [vmem:[#allocation3 + $0xb8] sm:$0xff]
          %v604 = vld [vmem:[#allocation3 + $0xc0] sm:$0xff]
          %v605 = vld [vmem:[#allocation3 + $0xc8] sm:$0xff]
          %v606 = vld [vmem:[#allocation3 + $0xd0] sm:$0xff]
          %v607 = vld [vmem:[#allocation3 + $0xd8] sm:$0xff]
          %v608 = vld [vmem:[#allocation3 + $0xe0] sm:$0xff]
          %v609 = vld [vmem:[#allocation3 + $0xe8] sm:$0xff]
          %v610 = vld [vmem:[#allocation3 + $0xf0] sm:$0xff]
          %v611 = vld [vmem:[#allocation3 + $0xf8] sm:$0xff]
          %v612 = vld [vmem:[%s4] sm:$0xf]
          %v614 = vperm.slane %v612, 0
          %v615 = vperm.slane %v612, 1
          %v616 = vperm.slane %v612, 2
          %v617 = vperm.slane %v612, 3
          %v654 = vunpack.c.l.b16 %v580
          %v655 = vunpack.c.h.b16 %v580
          %v656 = vunpack.c.l.b16 %v581
          %v657 = vunpack.c.h.b16 %v581
          %v658 = vunpack.c.l.b16 %v582
          %v659 = vunpack.c.h.b16 %v582
          %v660 = vunpack.c.l.b16 %v583
          %v661 = vunpack.c.h.b16 %v583
          %v662 = vunpack.c.l.b16 %v584
          %v663 = vunpack.c.h.b16 %v584
          %v664 = vunpack.c.l.b16 %v585
          %v665 = vunpack.c.h.b16 %v585
          %v666 = vunpack.c.l.b16 %v586
          %v667 = vunpack.c.h.b16 %v586
          %v668 = vunpack.c.l.b16 %v587
          %v669 = vunpack.c.h.b16 %v587
          %v670 = vunpack.c.l.b16 %v588
          %v671 = vunpack.c.h.b16 %v588
          %v672 = vunpack.c.l.b16 %v589
          %v673 = vunpack.c.h.b16 %v589
          %v674 = vunpack.c.l.b16 %v590
          %v675 = vunpack.c.h.b16 %v590
          %v676 = vunpack.c.l.b16 %v591
          %v677 = vunpack.c.h.b16 %v591
          %v678 = vunpack.c.l.b16 %v592
          %v679 = vunpack.c.h.b16 %v592
          %v680 = vunpack.c.l.b16 %v593
          %v681 = vunpack.c.h.b16 %v593
          %v682 = vunpack.c.l.b16 %v594
          %v683 = vunpack.c.h.b16 %v594
          %v684 = vunpack.c.l.b16 %v595
          %v685 = vunpack.c.h.b16 %v595
          %v686 = vunpack.c.l.b16 %v596
          %v687 = vunpack.c.h.b16 %v596
          %v688 = vunpack.c.l.b16 %v597
          %v689 = vunpack.c.h.b16 %v597
          %v690 = vunpack.c.l.b16 %v598
          %v691 = vunpack.c.h.b16 %v598
          %v692 = vunpack.c.l.b16 %v599
          %v693 = vunpack.c.h.b16 %v599
          %v694 = vunpack.c.l.b16 %v600
          %v695 = vunpack.c.h.b16 %v600
          %v696 = vunpack.c.l.b16 %v601
          %v697 = vunpack.c.h.b16 %v601
          %v698 = vunpack.c.l.b16 %v602
          %v699 = vunpack.c.h.b16 %v602
          %v700 = vunpack.c.l.b16 %v603
          %v701 = vunpack.c.h.b16 %v603
          %v702 = vunpack.c.l.b16 %v604
          %v703 = vunpack.c.h.b16 %v604
          %v704 = vunpack.c.l.b16 %v605
          %v705 = vunpack.c.h.b16 %v605
          %v706 = vunpack.c.l.b16 %v606
          %v707 = vunpack.c.h.b16 %v606
          %v708 = vunpack.c.l.b16 %v607
          %v709 = vunpack.c.h.b16 %v607
          %v710 = vunpack.c.l.b16 %v608
          %v711 = vunpack.c.h.b16 %v608
          %v712 = vunpack.c.l.b16 %v609
          %v713 = vunpack.c.h.b16 %v609
          %v714 = vunpack.c.l.b16 %v610
          %v715 = vunpack.c.h.b16 %v610
          %v716 = vunpack.c.l.b16 %v611
          %v717 = vunpack.c.h.b16 %v611
          %v718 = vpack.c.b16 %v658, %v654
          %v719 = vpack.c.b16 %v659, %v655
          %v720 = vpack.c.b16 %v660, %v656
          %v721 = vpack.c.b16 %v661, %v657
          %v722 = vpack.c.b16 %v666, %v662
          %v723 = vpack.c.b16 %v667, %v663
          %v724 = vpack.c.b16 %v668, %v664
          %v725 = vpack.c.b16 %v669, %v665
          %v726 = vpack.c.b16 %v674, %v670
          %v727 = vpack.c.b16 %v675, %v671
          %v728 = vpack.c.b16 %v676, %v672
          %v729 = vpack.c.b16 %v677, %v673
          %v730 = vpack.c.b16 %v682, %v678
          %v731 = vpack.c.b16 %v683, %v679
          %v732 = vpack.c.b16 %v684, %v680
          %v733 = vpack.c.b16 %v685, %v681
          %v734 = vpack.c.b16 %v690, %v686
          %v735 = vpack.c.b16 %v691, %v687
          %v736 = vpack.c.b16 %v692, %v688
          %v737 = vpack.c.b16 %v693, %v689
          %v738 = vpack.c.b16 %v698, %v694
          %v739 = vpack.c.b16 %v699, %v695
          %v740 = vpack.c.b16 %v700, %v696
          %v741 = vpack.c.b16 %v701, %v697
          %v742 = vpack.c.b16 %v706, %v702
          %v743 = vpack.c.b16 %v707, %v703
          %v744 = vpack.c.b16 %v708, %v704
          %v745 = vpack.c.b16 %v709, %v705
          %v746 = vpack.c.b16 %v714, %v710
          %v747 = vpack.c.b16 %v715, %v711
          %v748 = vpack.c.b16 %v716, %v712
          %v749 = vpack.c.b16 %v717, %v713
          %782 = vmatpush.bf16.msra.mxu0 %v746
          %783 = vmatpush.bf16.msra.mxu0 %v742
          %784 = vmatpush.bf16.msra.mxu0 %v738
          %785 = vmatpush.bf16.msra.mxu0 %v734
          %786 = vmatpush.bf16.msra.mxu0 %v730
          %787 = vmatpush.bf16.msra.mxu0 %v726
          %788 = vmatpush.bf16.msra.mxu0 %v722
          %789 = vmatpush.bf16.msra.mxu0 %v718
          %790 = vmatmul.bf16.gmra.mxu0 %v579
          %v791 = vpop.f32.mrf.mxu0
          %v792 = vadd.f32 %v614, %v791
          %v793 = vpop.f32.mrf.mxu0
          %794 = vdwg.mxu0
          %795 = vmatpush.bf16.msra.mxu0 %v747
          %796 = vmatpush.bf16.msra.mxu0 %v743
          %797 = vmatpush.bf16.msra.mxu0 %v739
          %798 = vmatpush.bf16.msra.mxu0 %v735
          %799 = vmatpush.bf16.msra.mxu0 %v731
          %800 = vmatpush.bf16.msra.mxu0 %v727
          %801 = vmatpush.bf16.msra.mxu0 %v723
          %802 = vmatpush.bf16.msra.mxu0 %v719
          %803 = vmatmul.bf16.gmra.mxu0 %v579
          %v804 = vpop.f32.mrf.mxu0
          %v805 = vadd.f32 %v615, %v804
          %v806 = vpop.f32.mrf.mxu0
          %807 = vdwg.mxu0
          %808 = vmatpush.bf16.msra.mxu0 %v748
          %809 = vmatpush.bf16.msra.mxu0 %v744
          %810 = vmatpush.bf16.msra.mxu0 %v740
          %811 = vmatpush.bf16.msra.mxu0 %v736
          %812 = vmatpush.bf16.msra.mxu0 %v732
          %813 = vmatpush.bf16.msra.mxu0 %v728
          %814 = vmatpush.bf16.msra.mxu0 %v724
          %815 = vmatpush.bf16.msra.mxu0 %v720
          %816 = vmatmul.bf16.gmra.mxu0 %v579
          %v817 = vpop.f32.mrf.mxu0
          %v818 = vadd.f32 %v616, %v817
          %v819 = vpop.f32.mrf.mxu0
          %820 = vdwg.mxu0
          %821 = vmatpush.bf16.msra.mxu0 %v749
          %822 = vmatpush.bf16.msra.mxu0 %v745
          %823 = vmatpush.bf16.msra.mxu0 %v741
          %824 = vmatpush.bf16.msra.mxu0 %v737
          %825 = vmatpush.bf16.msra.mxu0 %v733
          %826 = vmatpush.bf16.msra.mxu0 %v729
          %827 = vmatpush.bf16.msra.mxu0 %v725
          %828 = vmatpush.bf16.msra.mxu0 %v721
          %829 = vmatmul.bf16.gmra.mxu0 %v579
          %v830 = vpop.f32.mrf.mxu0
          %v831 = vadd.f32 %v617, %v830
          %v832 = vpop.f32.mrf.mxu0
          %833 = vdwg.mxu0
          %vm834 = vcmp.ge.f32.partialorder %v792, 0.0
          %vm835 = vcmp.ge.f32.partialorder %v805, 0.0
          %vm836 = vcmp.ge.f32.partialorder %v818, 0.0
          %vm837 = vcmp.ge.f32.partialorder %v831, 0.0
          %v838 = vmul.f32 %v792, 0.2
          %v839 = vmul.f32 %v805, 0.2
          %v840 = vmul.f32 %v818, 0.2
          %v841 = vmul.f32 %v831, 0.2
          %v842 = vsel %vm834, %v792, %v838
          %v843 = vsel %vm835, %v805, %v839
          %v844 = vsel %vm836, %v818, %v840
          %v845 = vsel %vm837, %v831, %v841
          %v846 = vadd.f32 %v842, %v843
          %v847 = vadd.f32 %v846, %v844
          %v848 = vadd.f32 %v847, %v845
          %849 = vadd.xlane.f32.xlu0 %v848
          %v850 = vpop.xlane.xlu0 %849
          %v851 = vrcp.pop 512.0
          %v852 = vmul.f32 512.0, %v851
          %v853 = vsub.f32 1.0, %v852
          %v854 = vmul.f32 %v851, %v853
          %v855 = vadd.f32 %v851, %v854
          %vm856 = vweird.f32 %v851
          %v857 = vsel %vm856, %v851, %v855
          %v858 = vmul.f32 %v850, %v857
          %v859 = vmul.f32 %v842, %v842
          %v860 = vmul.f32 %v843, %v843
          %v861 = vmul.f32 %v844, %v844
          %v862 = vmul.f32 %v845, %v845
          %v863 = vadd.f32 %v859, %v860
          %v864 = vadd.f32 %v863, %v861
          %v865 = vadd.f32 %v864, %v862
          %866 = vadd.xlane.f32.xlu0 %v865
          %v867 = vpop.xlane.xlu0 %866
          %v868 = vmul.f32 %v867, %v857
          %v869 = vsub.f32 %v842, %v858
          %v870 = vsub.f32 %v843, %v858
          %v871 = vsub.f32 %v844, %v858
          %v872 = vsub.f32 %v845, %v858
          %v873 = vmul.f32 %v858, %v858
          %v874 = vsub.f32 %v868, %v873
          %v875 = vadd.f32 %v874, 1e-05
          %v876 = vrsqrt.pop %v875
          %v877 = vmul.f32 %v876, %v875
          %v878 = vmul.f32 %v877, %v876
          %v879 = vmul.f32 0.5, %v878
          %v880 = vsub.f32 1.5, %v879
          %v881 = vmul.f32 %v876, %v880
          %vm882 = vweird.f32 %v875
          %vm883 = vweird.f32 %v876
          %vm884 = vmor %vm882, %vm883
          %v885 = vsel %vm884, %v876, %v881
          %v886 = vmul.f32 %v869, %v885
          %v887 = vmul.f32 %v870, %v885
          %v888 = vmul.f32 %v871, %v885
          %v889 = vmul.f32 %v872, %v885
          %v890 = vld [vmem:[%s5] sm:$0xf]
          %v892 = vperm.slane %v890, 0
          %v893 = vperm.slane %v890, 1
          %v894 = vperm.slane %v890, 2
          %v895 = vperm.slane %v890, 3
          %v900 = vmul.f32 %v886, %v892
          %v901 = vmul.f32 %v887, %v893
          %v902 = vmul.f32 %v888, %v894
          %v903 = vmul.f32 %v889, %v895
          %v904 = vld [vmem:[%s6] sm:$0xf]
          %v906 = vperm.slane %v904, 0
          %v907 = vperm.slane %v904, 1
          %v908 = vperm.slane %v904, 2
          %v909 = vperm.slane %v904, 3
          %v914 = vadd.f32 %v900, %v906
          %v915 = vadd.f32 %v901, %v907
          %v916 = vadd.f32 %v902, %v908
          %v917 = vadd.f32 %v903, %v909
          %v918 = vpack.c.bf16 %v914, %v914
          %v919 = vpack.c.bf16 %v915, %v915
          %v920 = vpack.c.bf16 %v916, %v916
          %v921 = vpack.c.bf16 %v917, %v917
          %v922 = vld [vmem:[#allocation6] sm:$0xff]
          %v923 = vld [vmem:[#allocation6 + $0x8] sm:$0xff]
          %v924 = vld [vmem:[#allocation6 + $0x10] sm:$0xff]
          %v925 = vld [vmem:[#allocation6 + $0x18] sm:$0xff]
          %v926 = vld [vmem:[#allocation6 + $0x20] sm:$0xff]
          %v927 = vld [vmem:[#allocation6 + $0x28] sm:$0xff]
          %v928 = vld [vmem:[#allocation6 + $0x30] sm:$0xff]
          %v929 = vld [vmem:[#allocation6 + $0x38] sm:$0xff]
          %v930 = vld [vmem:[#allocation6 + $0x40] sm:$0xff]
          %v931 = vld [vmem:[#allocation6 + $0x48] sm:$0xff]
          %v932 = vld [vmem:[#allocation6 + $0x50] sm:$0xff]
          %v933 = vld [vmem:[#allocation6 + $0x58] sm:$0xff]
          %v934 = vld [vmem:[#allocation6 + $0x60] sm:$0xff]
          %v935 = vld [vmem:[#allocation6 + $0x68] sm:$0xff]
          %v936 = vld [vmem:[#allocation6 + $0x70] sm:$0xff]
          %v937 = vld [vmem:[#allocation6 + $0x78] sm:$0xff]
          %v938 = vld [vmem:[#allocation6 + $0x80] sm:$0xff]
          %v939 = vld [vmem:[#allocation6 + $0x88] sm:$0xff]
          %v940 = vld [vmem:[#allocation6 + $0x90] sm:$0xff]
          %v941 = vld [vmem:[#allocation6 + $0x98] sm:$0xff]
          %v942 = vld [vmem:[#allocation6 + $0xa0] sm:$0xff]
          %v943 = vld [vmem:[#allocation6 + $0xa8] sm:$0xff]
          %v944 = vld [vmem:[#allocation6 + $0xb0] sm:$0xff]
          %v945 = vld [vmem:[#allocation6 + $0xb8] sm:$0xff]
          %v946 = vld [vmem:[#allocation6 + $0xc0] sm:$0xff]
          %v947 = vld [vmem:[#allocation6 + $0xc8] sm:$0xff]
          %v948 = vld [vmem:[#allocation6 + $0xd0] sm:$0xff]
          %v949 = vld [vmem:[#allocation6 + $0xd8] sm:$0xff]
          %v950 = vld [vmem:[#allocation6 + $0xe0] sm:$0xff]
          %v951 = vld [vmem:[#allocation6 + $0xe8] sm:$0xff]
          %v952 = vld [vmem:[#allocation6 + $0xf0] sm:$0xff]
          %v953 = vld [vmem:[#allocation6 + $0xf8] sm:$0xff]
          %v954 = vld [vmem:[#allocation6 + $0x100] sm:$0xff]
          %v955 = vld [vmem:[#allocation6 + $0x108] sm:$0xff]
          %v956 = vld [vmem:[#allocation6 + $0x110] sm:$0xff]
          %v957 = vld [vmem:[#allocation6 + $0x118] sm:$0xff]
          %v958 = vld [vmem:[#allocation6 + $0x120] sm:$0xff]
          %v959 = vld [vmem:[#allocation6 + $0x128] sm:$0xff]
          %v960 = vld [vmem:[#allocation6 + $0x130] sm:$0xff]
          %v961 = vld [vmem:[#allocation6 + $0x138] sm:$0xff]
          %v962 = vld [vmem:[#allocation6 + $0x140] sm:$0xff]
          %v963 = vld [vmem:[#allocation6 + $0x148] sm:$0xff]
          %v964 = vld [vmem:[#allocation6 + $0x150] sm:$0xff]
          %v965 = vld [vmem:[#allocation6 + $0x158] sm:$0xff]
          %v966 = vld [vmem:[#allocation6 + $0x160] sm:$0xff]
          %v967 = vld [vmem:[#allocation6 + $0x168] sm:$0xff]
          %v968 = vld [vmem:[#allocation6 + $0x170] sm:$0xff]
          %v969 = vld [vmem:[#allocation6 + $0x178] sm:$0xff]
          %v970 = vld [vmem:[#allocation6 + $0x180] sm:$0xff]
          %v971 = vld [vmem:[#allocation6 + $0x188] sm:$0xff]
          %v972 = vld [vmem:[#allocation6 + $0x190] sm:$0xff]
          %v973 = vld [vmem:[#allocation6 + $0x198] sm:$0xff]
          %v974 = vld [vmem:[#allocation6 + $0x1a0] sm:$0xff]
          %v975 = vld [vmem:[#allocation6 + $0x1a8] sm:$0xff]
          %v976 = vld [vmem:[#allocation6 + $0x1b0] sm:$0xff]
          %v977 = vld [vmem:[#allocation6 + $0x1b8] sm:$0xff]
          %v978 = vld [vmem:[#allocation6 + $0x1c0] sm:$0xff]
          %v979 = vld [vmem:[#allocation6 + $0x1c8] sm:$0xff]
          %v980 = vld [vmem:[#allocation6 + $0x1d0] sm:$0xff]
          %v981 = vld [vmem:[#allocation6 + $0x1d8] sm:$0xff]
          %v982 = vld [vmem:[#allocation6 + $0x1e0] sm:$0xff]
          %v983 = vld [vmem:[#allocation6 + $0x1e8] sm:$0xff]
          %v984 = vld [vmem:[#allocation6 + $0x1f0] sm:$0xff]
          %v985 = vld [vmem:[#allocation6 + $0x1f8] sm:$0xff]
          %v986 = vld [vmem:[%s8] sm:$0x3]
          %v988 = vperm.slane %v986, 0
          %v989 = vperm.slane %v986, 1
          %v1056 = vunpack.c.l.b16 %v922
          %v1057 = vunpack.c.h.b16 %v922
          %v1058 = vunpack.c.l.b16 %v923
          %v1059 = vunpack.c.h.b16 %v923
          %v1060 = vunpack.c.l.b16 %v924
          %v1061 = vunpack.c.h.b16 %v924
          %v1062 = vunpack.c.l.b16 %v925
          %v1063 = vunpack.c.h.b16 %v925
          %v1064 = vunpack.c.l.b16 %v926
          %v1065 = vunpack.c.h.b16 %v926
          %v1066 = vunpack.c.l.b16 %v927
          %v1067 = vunpack.c.h.b16 %v927
          %v1068 = vunpack.c.l.b16 %v928
          %v1069 = vunpack.c.h.b16 %v928
          %v1070 = vunpack.c.l.b16 %v929
          %v1071 = vunpack.c.h.b16 %v929
          %v1072 = vunpack.c.l.b16 %v930
          %v1073 = vunpack.c.h.b16 %v930
          %v1074 = vunpack.c.l.b16 %v931
          %v1075 = vunpack.c.h.b16 %v931
          %v1076 = vunpack.c.l.b16 %v932
          %v1077 = vunpack.c.h.b16 %v932
          %v1078 = vunpack.c.l.b16 %v933
          %v1079 = vunpack.c.h.b16 %v933
          %v1080 = vunpack.c.l.b16 %v934
          %v1081 = vunpack.c.h.b16 %v934
          %v1082 = vunpack.c.l.b16 %v935
          %v1083 = vunpack.c.h.b16 %v935
          %v1084 = vunpack.c.l.b16 %v936
          %v1085 = vunpack.c.h.b16 %v936
          %v1086 = vunpack.c.l.b16 %v937
          %v1087 = vunpack.c.h.b16 %v937
          %v1088 = vunpack.c.l.b16 %v938
          %v1089 = vunpack.c.h.b16 %v938
          %v1090 = vunpack.c.l.b16 %v939
          %v1091 = vunpack.c.h.b16 %v939
          %v1092 = vunpack.c.l.b16 %v940
          %v1093 = vunpack.c.h.b16 %v940
          %v1094 = vunpack.c.l.b16 %v941
          %v1095 = vunpack.c.h.b16 %v941
          %v1096 = vunpack.c.l.b16 %v942
          %v1097 = vunpack.c.h.b16 %v942
          %v1098 = vunpack.c.l.b16 %v943
          %v1099 = vunpack.c.h.b16 %v943
          %v1100 = vunpack.c.l.b16 %v944
          %v1101 = vunpack.c.h.b16 %v944
          %v1102 = vunpack.c.l.b16 %v945
          %v1103 = vunpack.c.h.b16 %v945
          %v1104 = vunpack.c.l.b16 %v946
          %v1105 = vunpack.c.h.b16 %v946
          %v1106 = vunpack.c.l.b16 %v947
          %v1107 = vunpack.c.h.b16 %v947
          %v1108 = vunpack.c.l.b16 %v948
          %v1109 = vunpack.c.h.b16 %v948
          %v1110 = vunpack.c.l.b16 %v949
          %v1111 = vunpack.c.h.b16 %v949
          %v1112 = vunpack.c.l.b16 %v950
          %v1113 = vunpack.c.h.b16 %v950
          %v1114 = vunpack.c.l.b16 %v951
          %v1115 = vunpack.c.h.b16 %v951
          %v1116 = vunpack.c.l.b16 %v952
          %v1117 = vunpack.c.h.b16 %v952
          %v1118 = vunpack.c.l.b16 %v953
          %v1119 = vunpack.c.h.b16 %v953
          %v1120 = vunpack.c.l.b16 %v954
          %v1121 = vunpack.c.h.b16 %v954
          %v1122 = vunpack.c.l.b16 %v955
          %v1123 = vunpack.c.h.b16 %v955
          %v1124 = vunpack.c.l.b16 %v956
          %v1125 = vunpack.c.h.b16 %v956
          %v1126 = vunpack.c.l.b16 %v957
          %v1127 = vunpack.c.h.b16 %v957
          %v1128 = vunpack.c.l.b16 %v958
          %v1129 = vunpack.c.h.b16 %v958
          %v1130 = vunpack.c.l.b16 %v959
          %v1131 = vunpack.c.h.b16 %v959
          %v1132 = vunpack.c.l.b16 %v960
          %v1133 = vunpack.c.h.b16 %v960
          %v1134 = vunpack.c.l.b16 %v961
          %v1135 = vunpack.c.h.b16 %v961
          %v1136 = vunpack.c.l.b16 %v962
          %v1137 = vunpack.c.h.b16 %v962
          %v1138 = vunpack.c.l.b16 %v963
          %v1139 = vunpack.c.h.b16 %v963
          %v1140 = vunpack.c.l.b16 %v964
          %v1141 = vunpack.c.h.b16 %v964
          %v1142 = vunpack.c.l.b16 %v965
          %v1143 = vunpack.c.h.b16 %v965
          %v1144 = vunpack.c.l.b16 %v966
          %v1145 = vunpack.c.h.b16 %v966
          %v1146 = vunpack.c.l.b16 %v967
          %v1147 = vunpack.c.h.b16 %v967
          %v1148 = vunpack.c.l.b16 %v968
          %v1149 = vunpack.c.h.b16 %v968
          %v1150 = vunpack.c.l.b16 %v969
          %v1151 = vunpack.c.h.b16 %v969
          %v1152 = vunpack.c.l.b16 %v970
          %v1153 = vunpack.c.h.b16 %v970
          %v1154 = vunpack.c.l.b16 %v971
          %v1155 = vunpack.c.h.b16 %v971
          %v1156 = vunpack.c.l.b16 %v972
          %v1157 = vunpack.c.h.b16 %v972
          %v1158 = vunpack.c.l.b16 %v973
          %v1159 = vunpack.c.h.b16 %v973
          %v1160 = vunpack.c.l.b16 %v974
          %v1161 = vunpack.c.h.b16 %v974
          %v1162 = vunpack.c.l.b16 %v975
          %v1163 = vunpack.c.h.b16 %v975
          %v1164 = vunpack.c.l.b16 %v976
          %v1165 = vunpack.c.h.b16 %v976
          %v1166 = vunpack.c.l.b16 %v977
          %v1167 = vunpack.c.h.b16 %v977
          %v1168 = vunpack.c.l.b16 %v978
          %v1169 = vunpack.c.h.b16 %v978
          %v1170 = vunpack.c.l.b16 %v979
          %v1171 = vunpack.c.h.b16 %v979
          %v1172 = vunpack.c.l.b16 %v980
          %v1173 = vunpack.c.h.b16 %v980
          %v1174 = vunpack.c.l.b16 %v981
          %v1175 = vunpack.c.h.b16 %v981
          %v1176 = vunpack.c.l.b16 %v982
          %v1177 = vunpack.c.h.b16 %v982
          %v1178 = vunpack.c.l.b16 %v983
          %v1179 = vunpack.c.h.b16 %v983
          %v1180 = vunpack.c.l.b16 %v984
          %v1181 = vunpack.c.h.b16 %v984
          %v1182 = vunpack.c.l.b16 %v985
          %v1183 = vunpack.c.h.b16 %v985
          %v1184 = vpack.c.b16 %v1058, %v1056
          %v1185 = vpack.c.b16 %v1059, %v1057
          %v1186 = vpack.c.b16 %v1062, %v1060
          %v1187 = vpack.c.b16 %v1063, %v1061
          %v1188 = vpack.c.b16 %v1066, %v1064
          %v1189 = vpack.c.b16 %v1067, %v1065
          %v1190 = vpack.c.b16 %v1070, %v1068
          %v1191 = vpack.c.b16 %v1071, %v1069
          %v1192 = vpack.c.b16 %v1074, %v1072
          %v1193 = vpack.c.b16 %v1075, %v1073
          %v1194 = vpack.c.b16 %v1078, %v1076
          %v1195 = vpack.c.b16 %v1079, %v1077
          %v1196 = vpack.c.b16 %v1082, %v1080
          %v1197 = vpack.c.b16 %v1083, %v1081
          %v1198 = vpack.c.b16 %v1086, %v1084
          %v1199 = vpack.c.b16 %v1087, %v1085
          %v1200 = vpack.c.b16 %v1090, %v1088
          %v1201 = vpack.c.b16 %v1091, %v1089
          %v1202 = vpack.c.b16 %v1094, %v1092
          %v1203 = vpack.c.b16 %v1095, %v1093
          %v1204 = vpack.c.b16 %v1098, %v1096
          %v1205 = vpack.c.b16 %v1099, %v1097
          %v1206 = vpack.c.b16 %v1102, %v1100
          %v1207 = vpack.c.b16 %v1103, %v1101
          %v1208 = vpack.c.b16 %v1106, %v1104
          %v1209 = vpack.c.b16 %v1107, %v1105
          %v1210 = vpack.c.b16 %v1110, %v1108
          %v1211 = vpack.c.b16 %v1111, %v1109
          %v1212 = vpack.c.b16 %v1114, %v1112
          %v1213 = vpack.c.b16 %v1115, %v1113
          %v1214 = vpack.c.b16 %v1118, %v1116
          %v1215 = vpack.c.b16 %v1119, %v1117
          %v1216 = vpack.c.b16 %v1122, %v1120
          %v1217 = vpack.c.b16 %v1123, %v1121
          %v1218 = vpack.c.b16 %v1126, %v1124
          %v1219 = vpack.c.b16 %v1127, %v1125
          %v1220 = vpack.c.b16 %v1130, %v1128
          %v1221 = vpack.c.b16 %v1131, %v1129
          %v1222 = vpack.c.b16 %v1134, %v1132
          %v1223 = vpack.c.b16 %v1135, %v1133
          %v1224 = vpack.c.b16 %v1138, %v1136
          %v1225 = vpack.c.b16 %v1139, %v1137
          %v1226 = vpack.c.b16 %v1142, %v1140
          %v1227 = vpack.c.b16 %v1143, %v1141
          %v1228 = vpack.c.b16 %v1146, %v1144
          %v1229 = vpack.c.b16 %v1147, %v1145
          %v1230 = vpack.c.b16 %v1150, %v1148
          %v1231 = vpack.c.b16 %v1151, %v1149
          %v1232 = vpack.c.b16 %v1154, %v1152
          %v1233 = vpack.c.b16 %v1155, %v1153
          %v1234 = vpack.c.b16 %v1158, %v1156
          %v1235 = vpack.c.b16 %v1159, %v1157
          %v1236 = vpack.c.b16 %v1162, %v1160
          %v1237 = vpack.c.b16 %v1163, %v1161
          %v1238 = vpack.c.b16 %v1166, %v1164
          %v1239 = vpack.c.b16 %v1167, %v1165
          %v1240 = vpack.c.b16 %v1170, %v1168
          %v1241 = vpack.c.b16 %v1171, %v1169
          %v1242 = vpack.c.b16 %v1174, %v1172
          %v1243 = vpack.c.b16 %v1175, %v1173
          %v1244 = vpack.c.b16 %v1178, %v1176
          %v1245 = vpack.c.b16 %v1179, %v1177
          %v1246 = vpack.c.b16 %v1182, %v1180
          %v1247 = vpack.c.b16 %v1183, %v1181
          %1312 = vmatpush.bf16.msra.mxu0 %v1198
          %1313 = vmatpush.bf16.msra.mxu0 %v1196
          %1314 = vmatpush.bf16.msra.mxu0 %v1194
          %1315 = vmatpush.bf16.msra.mxu0 %v1192
          %1316 = vmatpush.bf16.msra.mxu0 %v1190
          %1317 = vmatpush.bf16.msra.mxu0 %v1188
          %1318 = vmatpush.bf16.msra.mxu0 %v1186
          %1319 = vmatpush.bf16.msra.mxu0 %v1184
          %1320 = vmatmul.bf16.gmra.mxu0 %v918
          %v1321 = vpop.f32.mrf.mxu0
          %v1322 = vadd.f32 %v988, %v1321
          %v1323 = vpop.f32.mrf.mxu0
          %1324 = vdwg.mxu0
          %1325 = vmatpush.bf16.msra.mxu0 %v1214
          %1326 = vmatpush.bf16.msra.mxu0 %v1212
          %1327 = vmatpush.bf16.msra.mxu0 %v1210
          %1328 = vmatpush.bf16.msra.mxu0 %v1208
          %1329 = vmatpush.bf16.msra.mxu0 %v1206
          %1330 = vmatpush.bf16.msra.mxu0 %v1204
          %1331 = vmatpush.bf16.msra.mxu0 %v1202
          %1332 = vmatpush.bf16.msra.mxu0 %v1200
          %1333 = vmatmul.bf16.gmra.mxu0 %v919
          %v1334 = vpop.f32.mrf.mxu0
          %v1335 = vadd.f32 %v1322, %v1334
          %v1336 = vpop.f32.mrf.mxu0
          %1337 = vdwg.mxu0
          %1338 = vmatpush.bf16.msra.mxu0 %v1230
          %1339 = vmatpush.bf16.msra.mxu0 %v1228
          %1340 = vmatpush.bf16.msra.mxu0 %v1226
          %1341 = vmatpush.bf16.msra.mxu0 %v1224
          %1342 = vmatpush.bf16.msra.mxu0 %v1222
          %1343 = vmatpush.bf16.msra.mxu0 %v1220
          %1344 = vmatpush.bf16.msra.mxu0 %v1218
          %1345 = vmatpush.bf16.msra.mxu0 %v1216
          %1346 = vmatmul.bf16.gmra.mxu0 %v920
          %v1347 = vpop.f32.mrf.mxu0
          %v1348 = vadd.f32 %v1335, %v1347
          %v1349 = vpop.f32.mrf.mxu0
          %1350 = vdwg.mxu0
          %1351 = vmatpush.bf16.msra.mxu0 %v1246
          %1352 = vmatpush.bf16.msra.mxu0 %v1244
          %1353 = vmatpush.bf16.msra.mxu0 %v1242
          %1354 = vmatpush.bf16.msra.mxu0 %v1240
          %1355 = vmatpush.bf16.msra.mxu0 %v1238
          %1356 = vmatpush.bf16.msra.mxu0 %v1236
          %1357 = vmatpush.bf16.msra.mxu0 %v1234
          %1358 = vmatpush.bf16.msra.mxu0 %v1232
          %1359 = vmatmul.bf16.gmra.mxu0 %v921
          %v1360 = vpop.f32.mrf.mxu0
          %v1361 = vadd.f32 %v1348, %v1360
          %v1362 = vpop.f32.mrf.mxu0
          %1363 = vdwg.mxu0
          %1364 = vmatpush.bf16.msra.mxu0 %v1199
          %1365 = vmatpush.bf16.msra.mxu0 %v1197
          %1366 = vmatpush.bf16.msra.mxu0 %v1195
          %1367 = vmatpush.bf16.msra.mxu0 %v1193
          %1368 = vmatpush.bf16.msra.mxu0 %v1191
          %1369 = vmatpush.bf16.msra.mxu0 %v1189
          %1370 = vmatpush.bf16.msra.mxu0 %v1187
          %1371 = vmatpush.bf16.msra.mxu0 %v1185
          %1372 = vmatmul.bf16.gmra.mxu0 %v918
          %v1373 = vpop.f32.mrf.mxu0
          %v1374 = vadd.f32 %v989, %v1373
          %v1375 = vpop.f32.mrf.mxu0
          %1376 = vdwg.mxu0
          %1377 = vmatpush.bf16.msra.mxu0 %v1215
          %1378 = vmatpush.bf16.msra.mxu0 %v1213
          %1379 = vmatpush.bf16.msra.mxu0 %v1211
          %1380 = vmatpush.bf16.msra.mxu0 %v1209
          %1381 = vmatpush.bf16.msra.mxu0 %v1207
          %1382 = vmatpush.bf16.msra.mxu0 %v1205
          %1383 = vmatpush.bf16.msra.mxu0 %v1203
          %1384 = vmatpush.bf16.msra.mxu0 %v1201
          %1385 = vmatmul.bf16.gmra.mxu0 %v919
          %v1386 = vpop.f32.mrf.mxu0
          %v1387 = vadd.f32 %v1374, %v1386
          %v1388 = vpop.f32.mrf.mxu0
          %1389 = vdwg.mxu0
          %1390 = vmatpush.bf16.msra.mxu0 %v1231
          %1391 = vmatpush.bf16.msra.mxu0 %v1229
          %1392 = vmatpush.bf16.msra.mxu0 %v1227
          %1393 = vmatpush.bf16.msra.mxu0 %v1225
          %1394 = vmatpush.bf16.msra.mxu0 %v1223
          %1395 = vmatpush.bf16.msra.mxu0 %v1221
          %1396 = vmatpush.bf16.msra.mxu0 %v1219
          %1397 = vmatpush.bf16.msra.mxu0 %v1217
          %1398 = vmatmul.bf16.gmra.mxu0 %v920
          %v1399 = vpop.f32.mrf.mxu0
          %v1400 = vadd.f32 %v1387, %v1399
          %v1401 = vpop.f32.mrf.mxu0
          %1402 = vdwg.mxu0
          %1403 = vmatpush.bf16.msra.mxu0 %v1247
          %1404 = vmatpush.bf16.msra.mxu0 %v1245
          %1405 = vmatpush.bf16.msra.mxu0 %v1243
          %1406 = vmatpush.bf16.msra.mxu0 %v1241
          %1407 = vmatpush.bf16.msra.mxu0 %v1239
          %1408 = vmatpush.bf16.msra.mxu0 %v1237
          %1409 = vmatpush.bf16.msra.mxu0 %v1235
          %1410 = vmatpush.bf16.msra.mxu0 %v1233
          %1411 = vmatmul.bf16.gmra.mxu0 %v921
          %v1412 = vpop.f32.mrf.mxu0
          %v1413 = vadd.f32 %v1400, %v1412
          %v1414 = vpop.f32.mrf.mxu0
          %1415 = vdwg.mxu0
          %vm1416 = vcmp.ge.f32.partialorder %v1361, 0.0
          %vm1417 = vcmp.ge.f32.partialorder %v1413, 0.0
          %v1418 = vmul.f32 %v1361, 0.2
          %v1419 = vmul.f32 %v1413, 0.2
          %v1420 = vsel %vm1416, %v1361, %v1418
          %v1421 = vsel %vm1417, %v1413, %v1419
          %1422 = vst [vmem:[#allocation2] sm:$0xff] %v1420
          %1423 = vst [vmem:[#allocation2 + $0x8] sm:$0xff] %v1421
        $region68: #{dummy_enc_forward.1} parent=55 // pred_fallthru
          _
        %v1424 = vld [vmem:[#allocation2] sm:$0xff]
        %v1425 = vld [vmem:[#allocation2 + $0x8] sm:$0xff]
        %1426 = vst [vmem:[%s388] sm:$0xff] %v1424
        %1427 = vst [vmem:[%s388 + $0x8] sm:$0xff] %v1425
        %s1428 = sand.u32 %s252, 1
        %s1429 = scalar_lea.sflag [#allocation5], %s1428
        %s1430 = sand.u32 %s252, 1
        %s1431 = smul.addr %s1430, 16
        %s1432 = scalar_lea.vmem [#allocation8], %s1431
        // Predicated region
        $region69: #{dummy_enc_forward.1} parent=55 // pred_check
          %p1433 = pneg %p262
        $region70: #{dummy_enc_forward.1} parent=55 // pred_check_branch
          %1435 = sbr.rel (%p1433) target = $region72
        $region71: #{dummy_enc_forward.1} parent=55 // pred_region
          %1437 = vsyncadd %s1429, 0
          %s1438 = smul.addr %s31, 2
          %s1439 = smul.addr %s32, 2
          %s1440 = sadd.s32 %s1438, %s1439
          %s1441 = smul.addr %s30, 4
          %s1442 = sadd.s32 %s1440, %s1441
          %s1443 = smul.addr %s1442, 8
          %s1444 = scalar_lea.hbm %s9, %s1443
          %s1446 = sshll.u32 %s1432, 4
          %s1447 = int_to_ptr.vmem [resolvable:$true] %s1446
          %s1448 = sshll.u32 %s1444, 4
          %s1449 = int_to_ptr.hbm [resolvable:$true] %s1448
          %1451 = dma.vmem_to_hbm [thread:$0]  %s1447, 256, %s1449, %s1429
        $region72: #{dummy_enc_forward.1} parent=55 // pred_fallthru
          _
      $region56: #{dummy_enc_forward.1} parent=5 // pred_fallthru
        _
      %p1452 = scmp.le.s32.totalorder 2, %s20
      // Predicated region
      $region73: #{dummy_enc_forward.1} parent=5 // pred_check
        %p1453 = pneg %p1452
      $region74: #{dummy_enc_forward.1} parent=5 // pred_check_branch
        %1455 = sbr.rel (%p1453) target = $region76
      $region75: #{dummy_enc_forward.1} parent=5 // pred_region
        %s1456 = ssub.s32 %s20, 2
        // Predicated region
        $region77: #{dummy_enc_forward.1} parent=75 // pred_check
          %p1457 = pneg %p268
        $region78: #{dummy_enc_forward.1} parent=75 // pred_check_branch
          %1459 = sbr.rel (%p1457) target = $region80
        $region79: #{dummy_enc_forward.1} parent=75 // pred_region
          %s1460 = sand.u32 %s253, 1
          %s1461 = scalar_lea.sflag [#allocation5], %s1460
          %s1462 = sand.u32 %s253, 1
          %s1463 = smul.addr %s1462, 16
          %s1464 = scalar_lea.vmem [#allocation8], %s1463
          %1466 = dma.done %s1461, 256
        $region80: #{dummy_enc_forward.1} parent=75 // pred_fallthru
          _
      $region76: #{dummy_enc_forward.1} parent=5 // pred_fallthru
        _
    $region6: #{dummy_enc_forward.1} parent=1 // loop_footer
      %s24 = sadd.s32 1, %s20
    $region7: #{dummy_enc_forward.1} parent=1 // loop_footer_branch
      %19 = sbr.rel target = $region3
    $region8: #{dummy_enc_forward.1} parent=1 // loop_exit
      _
    %1467 = vsyncpa [#allocation4], 1
    %s1468 = scalar_lea.sflag [#allocation4], 1
    %1469 = vsyncpa %s1468, 1
    %1470 = vsyncpa [#allocation7], 1
    %1471 = vsyncpa [#allocation5], 1
    %s1472 = scalar_lea.sflag [#allocation5], 1
    %1473 = vsyncpa %s1472, 1

</llo_original>
